<compile_context>
chip_gen: v7x
topology: tpu7x:2x2x1
jax: 0.10.0
libtpu: 0.0.40
codegen_flags: <defaults>
</compile_context>

<pallas_src>
import math

import jax
import jax.numpy as jnp
from jax.experimental import pallas as pl
from jax.experimental.pallas import tpu as pltpu

# ----------------------------- model dims ---------------------------------
B = 2           # batch
S_T = 8         # target (decoder) sequence length
S_S = 8         # source (encoder) sequence length
D_MODEL = 32    # d_model
H = 4           # attention heads
D_K = D_MODEL // H
D_FF = 64       # feed-forward inner dim
EPS = 1e-6      # LayerNormalization epsilon

# column offsets inside the packed weight array w_pack : (D_MODEL, 320)
_OFF_QKV_S = 0                    # (D, 3D)  [wq_s | wk_s | wv_s]
_OFF_O_S = 3 * D_MODEL            # (D, D)
_OFF_Q_C = 4 * D_MODEL            # (D, D)
_OFF_KV_C = 5 * D_MODEL           # (D, 2D)  [wk_c | wv_c]
_OFF_O_C = 7 * D_MODEL            # (D, D)
_OFF_W1 = 8 * D_MODEL             # (D, D_FF)
_W_PACK_COLS = 8 * D_MODEL + D_FF  # 320


# ----------------------------- the kernel ---------------------------------
def decoder_layer_kernel(x_ref, enc_ref, tgt_mask_ref, src_mask_ref,
                         w_ref, w2_ref, vp_ref, out_ref):
    bf16 = jnp.bfloat16

    x = x_ref[...]                          # (S_T, D) f32 — one batch row
    enc = enc_ref[...]                      # (S_S, D) f32

    # packed vector params (row-indexed, offset-0 lane slices → essentially free)
    vp = vp_ref[...]                        # (8, D_FF) f32
    a0 = vp[0:1, :D_MODEL]; g0 = vp[1:2, :D_MODEL]
    a1 = vp[2:3, :D_MODEL]; g1 = vp[3:4, :D_MODEL]
    a2 = vp[4:5, :D_MODEL]; g2 = vp[5:6, :D_MODEL]
    b2 = vp[6:7, :D_MODEL]                  # (1, D)
    b1 = vp[7:8, :]                         # (1, D_FF)

    # packed matmul weights (static ref-view slices; bf16 cast once in wrapper)
    wqkv_s = w_ref[:, _OFF_QKV_S:_OFF_O_S]  # (D, 3D)
    wo_s = w_ref[:, _OFF_O_S:_OFF_Q_C]      # (D, D)
    wq_c = w_ref[:, _OFF_Q_C:_OFF_KV_C]     # (D, D)
    wkv_c = w_ref[:, _OFF_KV_C:_OFF_O_C]    # (D, 2D)
    wo_c = w_ref[:, _OFF_O_C:_OFF_W1]       # (D, D)
    w1 = w_ref[:, _OFF_W1:_W_PACK_COLS]     # (D, D_FF)
    w2 = w2_ref[...]                        # (D_FF, D)

    # mask == 0 computed once per mask (not per head)
    tgt_m0 = tgt_mask_ref[0] == 0.0         # (S_T, S_T) bool
    src_m0 = src_mask_ref[0] == 0.0         # (S_T, S_S) bool

    scale = 1.0 / math.sqrt(D_K)

    # ---- helpers ----------------------------------------------------------
    def layer_norm(v, alpha, bias):
        # tutorial LayerNormalization: unbiased std, eps added outside the sqrt.
        mean = jnp.mean(v, axis=-1, keepdims=True)
        diff = v - mean
        var = jnp.sum(diff * diff, axis=-1, keepdims=True) * (1.0 / (D_MODEL - 1))
        inv = pl.reciprocal(jnp.sqrt(var) + EPS, approx=False)   # divide -> EUP
        return alpha * (diff * inv) + bias

    def softmax(s):                                              # last dim, f32
        m = jnp.max(s, axis=-1, keepdims=True)
        e = jnp.exp(s - m)
        return e * pl.reciprocal(jnp.sum(e, axis=-1, keepdims=True), approx=False)

    def split_heads(t):
        # (S, D) -> (H, S, D_K): static lane slices stacked along a leading axis
        # (avoids minor-dim-splitting reshapes; leading-axis concat is cheap).
        return jnp.stack([t[:, h * D_K:(h + 1) * D_K] for h in range(H)], axis=0)

    def mha(q2, k2, v2, wo, m0):
        # q2 (Sq, D) bf16; k2/v2 (Sk, D) bf16; wo (D, D) bf16; m0 (Sq, Sk) bool
        q3, k3, v3 = split_heads(q2), split_heads(k2), split_heads(v2)
        s = jnp.einsum("hqd,hkd->hqk", q3, k3,
                       preferred_element_type=jnp.float32) * scale
        s = jnp.where(m0[None], -1e9, s)                 # torch masked_fill_
        p = softmax(s).astype(bf16)
        # TODO(synk): attention-prob dropout omitted — eval mode / p = 0.
        ctx = jnp.einsum("hqk,hkd->hqd", p, v3,
                         preferred_element_type=jnp.float32)     # (H, Sq, D_K)
        # heads-concat back to the lane axis -> ONE output projection matmul
        ctx2 = jnp.concatenate([ctx[h] for h in range(H)], axis=-1).astype(bf16)
        return jnp.dot(ctx2, wo, preferred_element_type=jnp.float32)  # (Sq, D)

    # ---- residual 0: pre-norm self attention ------------------------------
    h0 = layer_norm(x, a0, g0).astype(bf16)                      # (S_T, D)
    qkv = jnp.dot(h0, wqkv_s,
                  preferred_element_type=jnp.float32).astype(bf16)  # (S_T, 3D)
    q_s = qkv[:, 0:D_MODEL]                      # 32-lane-aligned splits
    k_s = qkv[:, D_MODEL:2 * D_MODEL]
    v_s = qkv[:, 2 * D_MODEL:3 * D_MODEL]
    x1 = x + mha(q_s, k_s, v_s, wo_s, tgt_m0)

    # ---- residual 1: pre-norm cross attention (encoder output is K/V) ------
    h1 = layer_norm(x1, a1, g1).astype(bf16)
    q_c = jnp.dot(h1, wq_c, preferred_element_type=jnp.float32).astype(bf16)
    kv = jnp.dot(enc.astype(bf16), wkv_c,
                 preferred_element_type=jnp.float32).astype(bf16)   # (S_S, 2D)
    k_c = kv[:, :D_MODEL]
    v_c = kv[:, D_MODEL:]
    x2 = x1 + mha(q_c, k_c, v_c, wo_c, src_m0)

    # ---- residual 2: pre-norm feed forward ---------------------------------
    h2 = layer_norm(x2, a2, g2).astype(bf16)                     # (S_T, D)
    ff = jnp.dot(h2, w1, preferred_element_type=jnp.float32) + b1
    ff = jnp.maximum(ff, 0.0).astype(bf16)
    # TODO(synk): FFN / residual dropout omitted — eval mode / p = 0.
    ff = jnp.dot(ff, w2, preferred_element_type=jnp.float32) + b2

    out_ref[...] = x2 + ff


# ----------------------------- the wrapper ---------------------------------
def decoder_layer(x, enc, src_mask, tgt_mask, p):
    bf16 = jnp.bfloat16

    # One DMA input for all attention weights + W1 (bf16, (in, out) layout so
    # the kernel computes x @ W); W2 stays separate (different row count).
    w_pack = jnp.concatenate(
        [p["wq_s"], p["wk_s"], p["wv_s"], p["wo_s"],
         p["wq_c"], p["wk_c"], p["wv_c"], p["wo_c"], p["w1"]],
        axis=1).astype(bf16)                                   # (D, 320)
    w2 = p["w2"].astype(bf16)                                  # (D_FF, D)

    # One DMA input for the 6 LayerNorm vectors + b2 + b1 (f32).
    pad = jnp.zeros((D_FF - D_MODEL,), jnp.float32)
    def _row(v):
        return jnp.concatenate([v, pad], axis=0)
    vparams = jnp.stack(
        [_row(p["a0"]), _row(p["g0"]), _row(p["a1"]), _row(p["g1"]),
         _row(p["a2"]), _row(p["g2"]), _row(p["b2"]), p["b1"]], axis=0)  # (8, 64)

    # Present activations 2-D so the kernel works on flat lane-dense tiles.
    x2d = x.reshape(B * S_T, D_MODEL)
    enc2d = enc.reshape(B * S_S, D_MODEL)

    out2d = pl.pallas_call(
        decoder_layer_kernel,
        out_shape=jax.ShapeDtypeStruct((B * S_T, D_MODEL), jnp.float32),
        grid=(B,),
        in_specs=[
            pl.BlockSpec((S_T, D_MODEL), lambda b: (b, 0)),           # x
            pl.BlockSpec((S_S, D_MODEL), lambda b: (b, 0)),           # enc out
            pl.BlockSpec((1, S_T, S_T), lambda b: (b, 0, 0)),         # tgt mask
            pl.BlockSpec((1, S_T, S_S), lambda b: (b, 0, 0)),         # src mask
            pl.BlockSpec((D_MODEL, _W_PACK_COLS), lambda b: (0, 0)),  # weights
            pl.BlockSpec((D_FF, D_MODEL), lambda b: (0, 0)),          # w2
            pl.BlockSpec((8, D_FF), lambda b: (0, 0)),                # vec params
        ],
        out_specs=pl.BlockSpec((S_T, D_MODEL), lambda b: (b, 0)),
        compiler_params=pltpu.CompilerParams(
            # batch axis split across the two TensorCores on v7x;
            # neutral on single-TC v5e / v6e.
            dimension_semantics=("parallel",)),
    )(x2d, enc2d, tgt_mask, src_mask, w_pack, w2, vparams)

    return out2d.reshape(B, S_T, D_MODEL)


# ----------------------------- param init ----------------------------------
def init_params(key):
    ks = jax.random.split(key, 12)
    sd = 1.0 / math.sqrt(D_MODEL)
    sf = 1.0 / math.sqrt(D_FF)

    def lin(k, din, dout, s):
        # weights stored as (in, out) so the kernel computes x @ W
        return jax.random.normal(k, (din, dout), jnp.float32) * s

    return {
        # self attention
        "wq_s": lin(ks[0], D_MODEL, D_MODEL, sd),
        "wk_s": lin(ks[1], D_MODEL, D_MODEL, sd),
        "wv_s": lin(ks[2], D_MODEL, D_MODEL, sd),
        "wo_s": lin(ks[3], D_MODEL, D_MODEL, sd),
        # cross attention
        "wq_c": lin(ks[4], D_MODEL, D_MODEL, sd),
        "wk_c": lin(ks[5], D_MODEL, D_MODEL, sd),
        "wv_c": lin(ks[6], D_MODEL, D_MODEL, sd),
        "wo_c": lin(ks[7], D_MODEL, D_MODEL, sd),
        # feed forward
        "w1": lin(ks[8], D_MODEL, D_FF, sd),
        "b1": jax.random.normal(ks[9], (D_FF,), jnp.float32) * sd,
        "w2": lin(ks[10], D_FF, D_MODEL, sf),
        "b2": jax.random.normal(ks[11], (D_MODEL,), jnp.float32) * sf,
        # layer norms (alpha = 1, bias = 0)
        "a0": jnp.ones((D_MODEL,), jnp.float32), "g0": jnp.zeros((D_MODEL,), jnp.float32),
        "a1": jnp.ones((D_MODEL,), jnp.float32), "g1": jnp.zeros((D_MODEL,), jnp.float32),
        "a2": jnp.ones((D_MODEL,), jnp.float32), "g2": jnp.zeros((D_MODEL,), jnp.float32),
    }


# ----------------------------- main -----------------------------------------
if __name__ == "__main__":
    key = jax.random.PRNGKey(0)
    k_x, k_enc, k_p = jax.random.split(key, 3)

    x = jax.random.normal(k_x, (B, S_T, D_MODEL), jnp.float32)
    enc_out = jax.random.normal(k_enc, (B, S_S, D_MODEL), jnp.float32)

    # causal target mask, all-ones source mask (float; 0 == masked)
    tgt_mask = jnp.broadcast_to(
        jnp.tril(jnp.ones((S_T, S_T), jnp.float32)), (B, S_T, S_T))
    src_mask = jnp.ones((B, S_T, S_S), jnp.float32)

    params = init_params(k_p)

    out = decoder_layer(x, enc_out, src_mask, tgt_mask, params)
    out = jax.block_until_ready(out)

    assert out.shape == (B, S_T, D_MODEL)
    assert bool(jnp.all(jnp.isfinite(out)))
    print("KERNEL_OK")
</pallas_src>

<mosaic_0001>
module attributes {stable_mosaic.version = 11 : i64} {
  func.func @decoder_layer_kernel(%arg0: i32, %arg1: memref<8x32xf32, #tpu.memory_space<vmem>>, %arg2: memref<8x32xf32, #tpu.memory_space<vmem>>, %arg3: memref<1x8x8xf32, #tpu.memory_space<vmem>>, %arg4: memref<1x8x8xf32, #tpu.memory_space<vmem>>, %arg5: memref<32x320xbf16, #tpu.memory_space<vmem>>, %arg6: memref<64x32xbf16, #tpu.memory_space<vmem>>, %arg7: memref<8x64xf32, #tpu.memory_space<vmem>>, %arg8: memref<8x32xf32, #tpu.memory_space<vmem>>) attributes {dimension_semantics = [#tpu.dimension_semantics<parallel>], iteration_bounds = array<i64: 2>, scalar_prefetch = 0 : i64, scratch_operands = 0 : i64, tpu.core_type = #tpu.core_type<tc>, window_params = [{transform_indices = @transform_0, window_bounds = array<i64: 8, 32>}, {transform_indices = @transform_1, window_bounds = array<i64: 8, 32>}, {transform_indices = @transform_2, window_bounds = array<i64: 1, 8, 8>}, {transform_indices = @transform_3, window_bounds = array<i64: 1, 8, 8>}, {pipeline_mode = #tpu.pipeline_mode<synchronous>, transform_indices = @transform_4, window_bounds = array<i64: 32, 320>}, {pipeline_mode = #tpu.pipeline_mode<synchronous>, transform_indices = @transform_5, window_bounds = array<i64: 64, 32>}, {pipeline_mode = #tpu.pipeline_mode<synchronous>, transform_indices = @transform_6, window_bounds = array<i64: 8, 64>}, {transform_indices = @transform_7, window_bounds = array<i64: 8, 32>}]} {
    %c0 = arith.constant 0 : index
    %c0_0 = arith.constant 0 : index
    %0 = vector.load %arg1[%c0, %c0_0] : memref<8x32xf32, #tpu.memory_space<vmem>>, vector<8x32xf32>
    %c0_1 = arith.constant 0 : index
    %c0_2 = arith.constant 0 : index
    %1 = vector.load %arg2[%c0_1, %c0_2] : memref<8x32xf32, #tpu.memory_space<vmem>>, vector<8x32xf32>
    %c0_3 = arith.constant 0 : index
    %c0_4 = arith.constant 0 : index
    %2 = vector.load %arg7[%c0_3, %c0_4] : memref<8x64xf32, #tpu.memory_space<vmem>>, vector<8x64xf32>
    %3 = vector.extract_strided_slice %2 {offsets = [0, 0], sizes = [1, 32], strides = [1, 1]} : vector<8x64xf32> to vector<1x32xf32>
    %4 = vector.extract_strided_slice %2 {offsets = [1, 0], sizes = [1, 32], strides = [1, 1]} : vector<8x64xf32> to vector<1x32xf32>
    %5 = vector.extract_strided_slice %2 {offsets = [2, 0], sizes = [1, 32], strides = [1, 1]} : vector<8x64xf32> to vector<1x32xf32>
    %6 = vector.extract_strided_slice %2 {offsets = [3, 0], sizes = [1, 32], strides = [1, 1]} : vector<8x64xf32> to vector<1x32xf32>
    %7 = vector.extract_strided_slice %2 {offsets = [4, 0], sizes = [1, 32], strides = [1, 1]} : vector<8x64xf32> to vector<1x32xf32>
    %8 = vector.extract_strided_slice %2 {offsets = [5, 0], sizes = [1, 32], strides = [1, 1]} : vector<8x64xf32> to vector<1x32xf32>
    %9 = vector.extract_strided_slice %2 {offsets = [6, 0], sizes = [1, 32], strides = [1, 1]} : vector<8x64xf32> to vector<1x32xf32>
    %10 = vector.extract_strided_slice %2 {offsets = [7, 0], sizes = [1, 64], strides = [1, 1]} : vector<8x64xf32> to vector<1x64xf32>
    %c0_5 = arith.constant 0 : index
    %c0_6 = arith.constant 0 : index
    %11 = vector.load %arg5[%c0_5, %c0_6] : memref<32x320xbf16, #tpu.memory_space<vmem>>, vector<32x96xbf16>
    %c0_7 = arith.constant 0 : index
    %c96 = arith.constant 96 : index
    %12 = vector.load %arg5[%c0_7, %c96] : memref<32x320xbf16, #tpu.memory_space<vmem>>, vector<32x32xbf16>
    %c0_8 = arith.constant 0 : index
    %c128 = arith.constant 128 : index
    %13 = vector.load %arg5[%c0_8, %c128] : memref<32x320xbf16, #tpu.memory_space<vmem>>, vector<32x32xbf16>
    %c0_9 = arith.constant 0 : index
    %c160 = arith.constant 160 : index
    %14 = vector.load %arg5[%c0_9, %c160] : memref<32x320xbf16, #tpu.memory_space<vmem>>, vector<32x64xbf16>
    %c0_10 = arith.constant 0 : index
    %c224 = arith.constant 224 : index
    %15 = vector.load %arg5[%c0_10, %c224] : memref<32x320xbf16, #tpu.memory_space<vmem>>, vector<32x32xbf16>
    %c0_11 = arith.constant 0 : index
    %c256 = arith.constant 256 : index
    %16 = vector.load %arg5[%c0_11, %c256] : memref<32x320xbf16, #tpu.memory_space<vmem>>, vector<32x64xbf16>
    %c0_12 = arith.constant 0 : index
    %c0_13 = arith.constant 0 : index
    %17 = vector.load %arg6[%c0_12, %c0_13] : memref<64x32xbf16, #tpu.memory_space<vmem>>, vector<64x32xbf16>
    %c0_14 = arith.constant 0 : index
    %c0_15 = arith.constant 0 : index
    %c0_16 = arith.constant 0 : index
    %18 = vector.load %arg3[%c0_14, %c0_15, %c0_16] : memref<1x8x8xf32, #tpu.memory_space<vmem>>, vector<1x8x8xf32>
    %19 = vector.shape_cast %18 : vector<1x8x8xf32> to vector<8x8xf32>
    %cst = arith.constant 0.000000e+00 : f32
    %20 = vector.broadcast %cst : f32 to vector<8x8xf32>
    %21 = arith.cmpf oeq, %19, %20 : vector<8x8xf32>
    %c0_17 = arith.constant 0 : index
    %c0_18 = arith.constant 0 : index
    %c0_19 = arith.constant 0 : index
    %22 = vector.load %arg4[%c0_17, %c0_18, %c0_19] : memref<1x8x8xf32, #tpu.memory_space<vmem>>, vector<1x8x8xf32>
    %23 = vector.shape_cast %22 : vector<1x8x8xf32> to vector<8x8xf32>
    %cst_20 = arith.constant 0.000000e+00 : f32
    %24 = vector.broadcast %cst_20 : f32 to vector<8x8xf32>
    %25 = arith.cmpf oeq, %23, %24 : vector<8x8xf32>
    %cst_21 = arith.constant dense<0.000000e+00> : vector<8xf32>
    %26 = vector.multi_reduction <add>, %0, %cst_21 [1] : vector<8x32xf32> to vector<8xf32>
    %27 = vector.shape_cast %26 : vector<8xf32> to vector<8x1xf32>
    %cst_22 = arith.constant 3.200000e+01 : f32
    %28 = vector.broadcast %cst_22 : f32 to vector<8x1xf32>
    %29 = arith.divf %27, %28 : vector<8x1xf32>
    %30 = vector.broadcast %29 : vector<8x1xf32> to vector<8x32xf32>
    %31 = arith.subf %0, %30 : vector<8x32xf32>
    %32 = arith.mulf %31, %31 : vector<8x32xf32>
    %cst_23 = arith.constant dense<0.000000e+00> : vector<8xf32>
    %33 = vector.multi_reduction <add>, %32, %cst_23 [1] : vector<8x32xf32> to vector<8xf32>
    %34 = vector.shape_cast %33 : vector<8xf32> to vector<8x1xf32>
    %cst_24 = arith.constant 0.0322580636 : f32
    %35 = vector.broadcast %cst_24 : f32 to vector<8x1xf32>
    %36 = arith.mulf %34, %35 : vector<8x1xf32>
    %37 = math.sqrt %36 : vector<8x1xf32>
    %cst_25 = arith.constant 9.99999997E-7 : f32
    %38 = vector.broadcast %cst_25 : f32 to vector<8x1xf32>
    %39 = arith.addf %37, %38 : vector<8x1xf32>
    %40 = tpu.reciprocal %39 : vector<8x1xf32> -> vector<8x1xf32>
    %41 = vector.broadcast %40 : vector<8x1xf32> to vector<8x32xf32>
    %42 = arith.mulf %31, %41 : vector<8x32xf32>
    %43 = vector.broadcast %3 : vector<1x32xf32> to vector<8x32xf32>
    %44 = arith.mulf %43, %42 : vector<8x32xf32>
    %45 = vector.broadcast %4 : vector<1x32xf32> to vector<8x32xf32>
    %46 = arith.addf %44, %45 : vector<8x32xf32>
    %47 = arith.truncf %46 : vector<8x32xf32> to vector<8x32xbf16>
    %cst_26 = arith.constant dense<0.000000e+00> : vector<8x96xf32>
    %48 = tpu.matmul %47, %11, %cst_26 {dimension_numbers = #tpu.dot_dimension_numbers<[1], [0], [0], [1], [0, 0, 1, 1], [], []>} : vector<8x32xbf16>, vector<32x96xbf16>, vector<8x96xf32> -> vector<8x96xf32>
    %49 = arith.truncf %48 : vector<8x96xf32> to vector<8x96xbf16>
    %50 = vector.extract_strided_slice %49 {offsets = [0, 0], sizes = [8, 32], strides = [1, 1]} : vector<8x96xbf16> to vector<8x32xbf16>
    %51 = vector.extract_strided_slice %49 {offsets = [0, 32], sizes = [8, 32], strides = [1, 1]} : vector<8x96xbf16> to vector<8x32xbf16>
    %52 = vector.extract_strided_slice %49 {offsets = [0, 64], sizes = [8, 32], strides = [1, 1]} : vector<8x96xbf16> to vector<8x32xbf16>
    %53 = vector.extract_strided_slice %50 {offsets = [0, 0], sizes = [8, 8], strides = [1, 1]} : vector<8x32xbf16> to vector<8x8xbf16>
    %54 = vector.extract_strided_slice %50 {offsets = [0, 8], sizes = [8, 8], strides = [1, 1]} : vector<8x32xbf16> to vector<8x8xbf16>
    %55 = vector.extract_strided_slice %50 {offsets = [0, 16], sizes = [8, 8], strides = [1, 1]} : vector<8x32xbf16> to vector<8x8xbf16>
    %56 = vector.extract_strided_slice %50 {offsets = [0, 24], sizes = [8, 8], strides = [1, 1]} : vector<8x32xbf16> to vector<8x8xbf16>
    %57 = vector.shape_cast %53 : vector<8x8xbf16> to vector<1x8x8xbf16>
    %58 = vector.shape_cast %54 : vector<8x8xbf16> to vector<1x8x8xbf16>
    %59 = vector.shape_cast %55 : vector<8x8xbf16> to vector<1x8x8xbf16>
    %60 = vector.shape_cast %56 : vector<8x8xbf16> to vector<1x8x8xbf16>
    %61 = tpu.concatenate %57, %58, %59, %60 in 0 : vector<1x8x8xbf16>, vector<1x8x8xbf16>, vector<1x8x8xbf16>, vector<1x8x8xbf16> -> vector<4x8x8xbf16>
    %62 = vector.extract_strided_slice %51 {offsets = [0, 0], sizes = [8, 8], strides = [1, 1]} : vector<8x32xbf16> to vector<8x8xbf16>
    %63 = vector.extract_strided_slice %51 {offsets = [0, 8], sizes = [8, 8], strides = [1, 1]} : vector<8x32xbf16> to vector<8x8xbf16>
    %64 = vector.extract_strided_slice %51 {offsets = [0, 16], sizes = [8, 8], strides = [1, 1]} : vector<8x32xbf16> to vector<8x8xbf16>
    %65 = vector.extract_strided_slice %51 {offsets = [0, 24], sizes = [8, 8], strides = [1, 1]} : vector<8x32xbf16> to vector<8x8xbf16>
    %66 = vector.shape_cast %62 : vector<8x8xbf16> to vector<1x8x8xbf16>
    %67 = vector.shape_cast %63 : vector<8x8xbf16> to vector<1x8x8xbf16>
    %68 = vector.shape_cast %64 : vector<8x8xbf16> to vector<1x8x8xbf16>
    %69 = vector.shape_cast %65 : vector<8x8xbf16> to vector<1x8x8xbf16>
    %70 = tpu.concatenate %66, %67, %68, %69 in 0 : vector<1x8x8xbf16>, vector<1x8x8xbf16>, vector<1x8x8xbf16>, vector<1x8x8xbf16> -> vector<4x8x8xbf16>
    %71 = vector.extract_strided_slice %52 {offsets = [0, 0], sizes = [8, 8], strides = [1, 1]} : vector<8x32xbf16> to vector<8x8xbf16>
    %72 = vector.extract_strided_slice %52 {offsets = [0, 8], sizes = [8, 8], strides = [1, 1]} : vector<8x32xbf16> to vector<8x8xbf16>
    %73 = vector.extract_strided_slice %52 {offsets = [0, 16], sizes = [8, 8], strides = [1, 1]} : vector<8x32xbf16> to vector<8x8xbf16>
    %74 = vector.extract_strided_slice %52 {offsets = [0, 24], sizes = [8, 8], strides = [1, 1]} : vector<8x32xbf16> to vector<8x8xbf16>
    %75 = vector.shape_cast %71 : vector<8x8xbf16> to vector<1x8x8xbf16>
    %76 = vector.shape_cast %72 : vector<8x8xbf16> to vector<1x8x8xbf16>
    %77 = vector.shape_cast %73 : vector<8x8xbf16> to vector<1x8x8xbf16>
    %78 = vector.shape_cast %74 : vector<8x8xbf16> to vector<1x8x8xbf16>
    %79 = tpu.concatenate %75, %76, %77, %78 in 0 : vector<1x8x8xbf16>, vector<1x8x8xbf16>, vector<1x8x8xbf16>, vector<1x8x8xbf16> -> vector<4x8x8xbf16>
    "tpu.trace_start"() <{level = 10 : i32, message = "hqd,hkd->hqk"}> : () -> ()
    %cst_27 = arith.constant dense<0.000000e+00> : vector<4x8x8xf32>
    %80 = tpu.matmul %61, %70, %cst_27 {dimension_numbers = #tpu.dot_dimension_numbers<[2], [2], [1], [1], [0, 0, 0, 1, 1, 1], [0], [0]>} : vector<4x8x8xbf16>, vector<4x8x8xbf16>, vector<4x8x8xf32> -> vector<4x8x8xf32>
    "tpu.trace_stop"() : () -> ()
    %cst_28 = arith.constant 0.353553385 : f32
    %81 = vector.broadcast %cst_28 : f32 to vector<4x8x8xf32>
    %82 = arith.mulf %80, %81 : vector<4x8x8xf32>
    %83 = vector.shape_cast %21 : vector<8x8xi1> to vector<1x8x8xi1>
    %cst_29 = arith.constant -1.000000e+09 : f32
    %84 = vector.shape_cast %83 : vector<1x8x8xi1> to vector<1x8x8xi1>
    %85 = vector.broadcast %84 : vector<1x8x8xi1> to vector<4x8x8xi1>
    %86 = vector.broadcast %cst_29 : f32 to vector<4x8x8xf32>
    %87 = arith.select %85, %86, %82 : vector<4x8x8xi1>, vector<4x8x8xf32>
    %cst_30 = arith.constant dense<0xFF800000> : vector<4x8xf32>
    %88 = vector.multi_reduction <maximumf>, %87, %cst_30 [2] : vector<4x8x8xf32> to vector<4x8xf32>
    %89 = vector.shape_cast %88 : vector<4x8xf32> to vector<4x8x1xf32>
    %90 = vector.broadcast %89 : vector<4x8x1xf32> to vector<4x8x8xf32>
    %91 = arith.subf %87, %90 : vector<4x8x8xf32>
    %92 = math.exp %91 : vector<4x8x8xf32>
    %cst_31 = arith.constant dense<0.000000e+00> : vector<4x8xf32>
    %93 = vector.multi_reduction <add>, %92, %cst_31 [2] : vector<4x8x8xf32> to vector<4x8xf32>
    %94 = vector.shape_cast %93 : vector<4x8xf32> to vector<4x8x1xf32>
    %95 = tpu.reciprocal %94 : vector<4x8x1xf32> -> vector<4x8x1xf32>
    %96 = vector.broadcast %95 : vector<4x8x1xf32> to vector<4x8x8xf32>
    %97 = arith.mulf %92, %96 : vector<4x8x8xf32>
    %98 = arith.truncf %97 : vector<4x8x8xf32> to vector<4x8x8xbf16>
    "tpu.trace_start"() <{level = 10 : i32, message = "hqk,hkd->hqd"}> : () -> ()
    %cst_32 = arith.constant dense<0.000000e+00> : vector<4x8x8xf32>
    %99 = tpu.matmul %98, %79, %cst_32 {dimension_numbers = #tpu.dot_dimension_numbers<[2], [1], [1], [2], [0, 0, 0, 1, 1, 2], [0], [0]>} : vector<4x8x8xbf16>, vector<4x8x8xbf16>, vector<4x8x8xf32> -> vector<4x8x8xf32>
    "tpu.trace_stop"() : () -> ()
    %100 = vector.extract_strided_slice %99 {offsets = [0, 0, 0], sizes = [1, 8, 8], strides = [1, 1, 1]} : vector<4x8x8xf32> to vector<1x8x8xf32>
    %101 = vector.shape_cast %100 : vector<1x8x8xf32> to vector<8x8xf32>
    %102 = vector.extract_strided_slice %99 {offsets = [1, 0, 0], sizes = [1, 8, 8], strides = [1, 1, 1]} : vector<4x8x8xf32> to vector<1x8x8xf32>
    %103 = vector.shape_cast %102 : vector<1x8x8xf32> to vector<8x8xf32>
    %104 = vector.extract_strided_slice %99 {offsets = [2, 0, 0], sizes = [1, 8, 8], strides = [1, 1, 1]} : vector<4x8x8xf32> to vector<1x8x8xf32>
    %105 = vector.shape_cast %104 : vector<1x8x8xf32> to vector<8x8xf32>
    %106 = vector.extract_strided_slice %99 {offsets = [3, 0, 0], sizes = [1, 8, 8], strides = [1, 1, 1]} : vector<4x8x8xf32> to vector<1x8x8xf32>
    %107 = vector.shape_cast %106 : vector<1x8x8xf32> to vector<8x8xf32>
    %108 = tpu.concatenate %101, %103, %105, %107 in 1 : vector<8x8xf32>, vector<8x8xf32>, vector<8x8xf32>, vector<8x8xf32> -> vector<8x32xf32>
    %109 = arith.truncf %108 : vector<8x32xf32> to vector<8x32xbf16>
    %cst_33 = arith.constant dense<0.000000e+00> : vector<8x32xf32>
    %110 = tpu.matmul %109, %12, %cst_33 {dimension_numbers = #tpu.dot_dimension_numbers<[1], [0], [0], [1], [0, 0, 1, 1], [], []>} : vector<8x32xbf16>, vector<32x32xbf16>, vector<8x32xf32> -> vector<8x32xf32>
    %111 = arith.addf %0, %110 : vector<8x32xf32>
    %cst_34 = arith.constant dense<0.000000e+00> : vector<8xf32>
    %112 = vector.multi_reduction <add>, %111, %cst_34 [1] : vector<8x32xf32> to vector<8xf32>
    %113 = vector.shape_cast %112 : vector<8xf32> to vector<8x1xf32>
    %cst_35 = arith.constant 3.200000e+01 : f32
    %114 = vector.broadcast %cst_35 : f32 to vector<8x1xf32>
    %115 = arith.divf %113, %114 : vector<8x1xf32>
    %116 = vector.broadcast %115 : vector<8x1xf32> to vector<8x32xf32>
    %117 = arith.subf %111, %116 : vector<8x32xf32>
    %118 = arith.mulf %117, %117 : vector<8x32xf32>
    %cst_36 = arith.constant dense<0.000000e+00> : vector<8xf32>
    %119 = vector.multi_reduction <add>, %118, %cst_36 [1] : vector<8x32xf32> to vector<8xf32>
    %120 = vector.shape_cast %119 : vector<8xf32> to vector<8x1xf32>
    %cst_37 = arith.constant 0.0322580636 : f32
    %121 = vector.broadcast %cst_37 : f32 to vector<8x1xf32>
    %122 = arith.mulf %120, %121 : vector<8x1xf32>
    %123 = math.sqrt %122 : vector<8x1xf32>
    %cst_38 = arith.constant 9.99999997E-7 : f32
    %124 = vector.broadcast %cst_38 : f32 to vector<8x1xf32>
    %125 = arith.addf %123, %124 : vector<8x1xf32>
    %126 = tpu.reciprocal %125 : vector<8x1xf32> -> vector<8x1xf32>
    %127 = vector.broadcast %126 : vector<8x1xf32> to vector<8x32xf32>
    %128 = arith.mulf %117, %127 : vector<8x32xf32>
    %129 = vector.broadcast %5 : vector<1x32xf32> to vector<8x32xf32>
    %130 = arith.mulf %129, %128 : vector<8x32xf32>
    %131 = vector.broadcast %6 : vector<1x32xf32> to vector<8x32xf32>
    %132 = arith.addf %130, %131 : vector<8x32xf32>
    %133 = arith.truncf %132 : vector<8x32xf32> to vector<8x32xbf16>
    %cst_39 = arith.constant dense<0.000000e+00> : vector<8x32xf32>
    %134 = tpu.matmul %133, %13, %cst_39 {dimension_numbers = #tpu.dot_dimension_numbers<[1], [0], [0], [1], [0, 0, 1, 1], [], []>} : vector<8x32xbf16>, vector<32x32xbf16>, vector<8x32xf32> -> vector<8x32xf32>
    %135 = arith.truncf %134 : vector<8x32xf32> to vector<8x32xbf16>
    %136 = arith.truncf %1 : vector<8x32xf32> to vector<8x32xbf16>
    %cst_40 = arith.constant dense<0.000000e+00> : vector<8x64xf32>
    %137 = tpu.matmul %136, %14, %cst_40 {dimension_numbers = #tpu.dot_dimension_numbers<[1], [0], [0], [1], [0, 0, 1, 1], [], []>} : vector<8x32xbf16>, vector<32x64xbf16>, vector<8x64xf32> -> vector<8x64xf32>
    %138 = arith.truncf %137 : vector<8x64xf32> to vector<8x64xbf16>
    %139 = vector.extract_strided_slice %138 {offsets = [0, 0], sizes = [8, 32], strides = [1, 1]} : vector<8x64xbf16> to vector<8x32xbf16>
    %140 = vector.extract_strided_slice %138 {offsets = [0, 32], sizes = [8, 32], strides = [1, 1]} : vector<8x64xbf16> to vector<8x32xbf16>
    %141 = vector.extract_strided_slice %135 {offsets = [0, 0], sizes = [8, 8], strides = [1, 1]} : vector<8x32xbf16> to vector<8x8xbf16>
    %142 = vector.extract_strided_slice %135 {offsets = [0, 8], sizes = [8, 8], strides = [1, 1]} : vector<8x32xbf16> to vector<8x8xbf16>
    %143 = vector.extract_strided_slice %135 {offsets = [0, 16], sizes = [8, 8], strides = [1, 1]} : vector<8x32xbf16> to vector<8x8xbf16>
    %144 = vector.extract_strided_slice %135 {offsets = [0, 24], sizes = [8, 8], strides = [1, 1]} : vector<8x32xbf16> to vector<8x8xbf16>
    %145 = vector.shape_cast %141 : vector<8x8xbf16> to vector<1x8x8xbf16>
    %146 = vector.shape_cast %142 : vector<8x8xbf16> to vector<1x8x8xbf16>
    %147 = vector.shape_cast %143 : vector<8x8xbf16> to vector<1x8x8xbf16>
    %148 = vector.shape_cast %144 : vector<8x8xbf16> to vector<1x8x8xbf16>
    %149 = tpu.concatenate %145, %146, %147, %148 in 0 : vector<1x8x8xbf16>, vector<1x8x8xbf16>, vector<1x8x8xbf16>, vector<1x8x8xbf16> -> vector<4x8x8xbf16>
    %150 = vector.extract_strided_slice %139 {offsets = [0, 0], sizes = [8, 8], strides = [1, 1]} : vector<8x32xbf16> to vector<8x8xbf16>
    %151 = vector.extract_strided_slice %139 {offsets = [0, 8], sizes = [8, 8], strides = [1, 1]} : vector<8x32xbf16> to vector<8x8xbf16>
    %152 = vector.extract_strided_slice %139 {offsets = [0, 16], sizes = [8, 8], strides = [1, 1]} : vector<8x32xbf16> to vector<8x8xbf16>
    %153 = vector.extract_strided_slice %139 {offsets = [0, 24], sizes = [8, 8], strides = [1, 1]} : vector<8x32xbf16> to vector<8x8xbf16>
    %154 = vector.shape_cast %150 : vector<8x8xbf16> to vector<1x8x8xbf16>
    %155 = vector.shape_cast %151 : vector<8x8xbf16> to vector<1x8x8xbf16>
    %156 = vector.shape_cast %152 : vector<8x8xbf16> to vector<1x8x8xbf16>
    %157 = vector.shape_cast %153 : vector<8x8xbf16> to vector<1x8x8xbf16>
    %158 = tpu.concatenate %154, %155, %156, %157 in 0 : vector<1x8x8xbf16>, vector<1x8x8xbf16>, vector<1x8x8xbf16>, vector<1x8x8xbf16> -> vector<4x8x8xbf16>
    %159 = vector.extract_strided_slice %140 {offsets = [0, 0], sizes = [8, 8], strides = [1, 1]} : vector<8x32xbf16> to vector<8x8xbf16>
    %160 = vector.extract_strided_slice %140 {offsets = [0, 8], sizes = [8, 8], strides = [1, 1]} : vector<8x32xbf16> to vector<8x8xbf16>
    %161 = vector.extract_strided_slice %140 {offsets = [0, 16], sizes = [8, 8], strides = [1, 1]} : vector<8x32xbf16> to vector<8x8xbf16>
    %162 = vector.extract_strided_slice %140 {offsets = [0, 24], sizes = [8, 8], strides = [1, 1]} : vector<8x32xbf16> to vector<8x8xbf16>
    %163 = vector.shape_cast %159 : vector<8x8xbf16> to vector<1x8x8xbf16>
    %164 = vector.shape_cast %160 : vector<8x8xbf16> to vector<1x8x8xbf16>
    %165 = vector.shape_cast %161 : vector<8x8xbf16> to vector<1x8x8xbf16>
    %166 = vector.shape_cast %162 : vector<8x8xbf16> to vector<1x8x8xbf16>
    %167 = tpu.concatenate %163, %164, %165, %166 in 0 : vector<1x8x8xbf16>, vector<1x8x8xbf16>, vector<1x8x8xbf16>, vector<1x8x8xbf16> -> vector<4x8x8xbf16>
    "tpu.trace_start"() <{level = 10 : i32, message = "hqd,hkd->hqk"}> : () -> ()
    %cst_41 = arith.constant dense<0.000000e+00> : vector<4x8x8xf32>
    %168 = tpu.matmul %149, %158, %cst_41 {dimension_numbers = #tpu.dot_dimension_numbers<[2], [2], [1], [1], [0, 0, 0, 1, 1, 1], [0], [0]>} : vector<4x8x8xbf16>, vector<4x8x8xbf16>, vector<4x8x8xf32> -> vector<4x8x8xf32>
    "tpu.trace_stop"() : () -> ()
    %cst_42 = arith.constant 0.353553385 : f32
    %169 = vector.broadcast %cst_42 : f32 to vector<4x8x8xf32>
    %170 = arith.mulf %168, %169 : vector<4x8x8xf32>
    %171 = vector.shape_cast %25 : vector<8x8xi1> to vector<1x8x8xi1>
    %cst_43 = arith.constant -1.000000e+09 : f32
    %172 = vector.shape_cast %171 : vector<1x8x8xi1> to vector<1x8x8xi1>
    %173 = vector.broadcast %172 : vector<1x8x8xi1> to vector<4x8x8xi1>
    %174 = vector.broadcast %cst_43 : f32 to vector<4x8x8xf32>
    %175 = arith.select %173, %174, %170 : vector<4x8x8xi1>, vector<4x8x8xf32>
    %cst_44 = arith.constant dense<0xFF800000> : vector<4x8xf32>
    %176 = vector.multi_reduction <maximumf>, %175, %cst_44 [2] : vector<4x8x8xf32> to vector<4x8xf32>
    %177 = vector.shape_cast %176 : vector<4x8xf32> to vector<4x8x1xf32>
    %178 = vector.broadcast %177 : vector<4x8x1xf32> to vector<4x8x8xf32>
    %179 = arith.subf %175, %178 : vector<4x8x8xf32>
    %180 = math.exp %179 : vector<4x8x8xf32>
    %cst_45 = arith.constant dense<0.000000e+00> : vector<4x8xf32>
    %181 = vector.multi_reduction <add>, %180, %cst_45 [2] : vector<4x8x8xf32> to vector<4x8xf32>
    %182 = vector.shape_cast %181 : vector<4x8xf32> to vector<4x8x1xf32>
    %183 = tpu.reciprocal %182 : vector<4x8x1xf32> -> vector<4x8x1xf32>
    %184 = vector.broadcast %183 : vector<4x8x1xf32> to vector<4x8x8xf32>
    %185 = arith.mulf %180, %184 : vector<4x8x8xf32>
    %186 = arith.truncf %185 : vector<4x8x8xf32> to vector<4x8x8xbf16>
    "tpu.trace_start"() <{level = 10 : i32, message = "hqk,hkd->hqd"}> : () -> ()
    %cst_46 = arith.constant dense<0.000000e+00> : vector<4x8x8xf32>
    %187 = tpu.matmul %186, %167, %cst_46 {dimension_numbers = #tpu.dot_dimension_numbers<[2], [1], [1], [2], [0, 0, 0, 1, 1, 2], [0], [0]>} : vector<4x8x8xbf16>, vector<4x8x8xbf16>, vector<4x8x8xf32> -> vector<4x8x8xf32>
    "tpu.trace_stop"() : () -> ()
    %188 = vector.extract_strided_slice %187 {offsets = [0, 0, 0], sizes = [1, 8, 8], strides = [1, 1, 1]} : vector<4x8x8xf32> to vector<1x8x8xf32>
    %189 = vector.shape_cast %188 : vector<1x8x8xf32> to vector<8x8xf32>
    %190 = vector.extract_strided_slice %187 {offsets = [1, 0, 0], sizes = [1, 8, 8], strides = [1, 1, 1]} : vector<4x8x8xf32> to vector<1x8x8xf32>
    %191 = vector.shape_cast %190 : vector<1x8x8xf32> to vector<8x8xf32>
    %192 = vector.extract_strided_slice %187 {offsets = [2, 0, 0], sizes = [1, 8, 8], strides = [1, 1, 1]} : vector<4x8x8xf32> to vector<1x8x8xf32>
    %193 = vector.shape_cast %192 : vector<1x8x8xf32> to vector<8x8xf32>
    %194 = vector.extract_strided_slice %187 {offsets = [3, 0, 0], sizes = [1, 8, 8], strides = [1, 1, 1]} : vector<4x8x8xf32> to vector<1x8x8xf32>
    %195 = vector.shape_cast %194 : vector<1x8x8xf32> to vector<8x8xf32>
    %196 = tpu.concatenate %189, %191, %193, %195 in 1 : vector<8x8xf32>, vector<8x8xf32>, vector<8x8xf32>, vector<8x8xf32> -> vector<8x32xf32>
    %197 = arith.truncf %196 : vector<8x32xf32> to vector<8x32xbf16>
    %cst_47 = arith.constant dense<0.000000e+00> : vector<8x32xf32>
    %198 = tpu.matmul %197, %15, %cst_47 {dimension_numbers = #tpu.dot_dimension_numbers<[1], [0], [0], [1], [0, 0, 1, 1], [], []>} : vector<8x32xbf16>, vector<32x32xbf16>, vector<8x32xf32> -> vector<8x32xf32>
    %199 = arith.addf %111, %198 : vector<8x32xf32>
    %cst_48 = arith.constant dense<0.000000e+00> : vector<8xf32>
    %200 = vector.multi_reduction <add>, %199, %cst_48 [1] : vector<8x32xf32> to vector<8xf32>
    %201 = vector.shape_cast %200 : vector<8xf32> to vector<8x1xf32>
    %cst_49 = arith.constant 3.200000e+01 : f32
    %202 = vector.broadcast %cst_49 : f32 to vector<8x1xf32>
    %203 = arith.divf %201, %202 : vector<8x1xf32>
    %204 = vector.broadcast %203 : vector<8x1xf32> to vector<8x32xf32>
    %205 = arith.subf %199, %204 : vector<8x32xf32>
    %206 = arith.mulf %205, %205 : vector<8x32xf32>
    %cst_50 = arith.constant dense<0.000000e+00> : vector<8xf32>
    %207 = vector.multi_reduction <add>, %206, %cst_50 [1] : vector<8x32xf32> to vector<8xf32>
    %208 = vector.shape_cast %207 : vector<8xf32> to vector<8x1xf32>
    %cst_51 = arith.constant 0.0322580636 : f32
    %209 = vector.broadcast %cst_51 : f32 to vector<8x1xf32>
    %210 = arith.mulf %208, %209 : vector<8x1xf32>
    %211 = math.sqrt %210 : vector<8x1xf32>
    %cst_52 = arith.constant 9.99999997E-7 : f32
    %212 = vector.broadcast %cst_52 : f32 to vector<8x1xf32>
    %213 = arith.addf %211, %212 : vector<8x1xf32>
    %214 = tpu.reciprocal %213 : vector<8x1xf32> -> vector<8x1xf32>
    %215 = vector.broadcast %214 : vector<8x1xf32> to vector<8x32xf32>
    %216 = arith.mulf %205, %215 : vector<8x32xf32>
    %217 = vector.broadcast %7 : vector<1x32xf32> to vector<8x32xf32>
    %218 = arith.mulf %217, %216 : vector<8x32xf32>
    %219 = vector.broadcast %8 : vector<1x32xf32> to vector<8x32xf32>
    %220 = arith.addf %218, %219 : vector<8x32xf32>
    %221 = arith.truncf %220 : vector<8x32xf32> to vector<8x32xbf16>
    %cst_53 = arith.constant dense<0.000000e+00> : vector<8x64xf32>
    %222 = tpu.matmul %221, %16, %cst_53 {dimension_numbers = #tpu.dot_dimension_numbers<[1], [0], [0], [1], [0, 0, 1, 1], [], []>} : vector<8x32xbf16>, vector<32x64xbf16>, vector<8x64xf32> -> vector<8x64xf32>
    %223 = vector.broadcast %10 : vector<1x64xf32> to vector<8x64xf32>
    %224 = arith.addf %222, %223 : vector<8x64xf32>
    %cst_54 = arith.constant 0.000000e+00 : f32
    %225 = vector.broadcast %cst_54 : f32 to vector<8x64xf32>
    %226 = arith.maximumf %224, %225 : vector<8x64xf32>
    %227 = arith.truncf %226 : vector<8x64xf32> to vector<8x64xbf16>
    %cst_55 = arith.constant dense<0.000000e+00> : vector<8x32xf32>
    %228 = tpu.matmul %227, %17, %cst_55 {dimension_numbers = #tpu.dot_dimension_numbers<[1], [0], [0], [1], [0, 0, 1, 1], [], []>} : vector<8x64xbf16>, vector<64x32xbf16>, vector<8x32xf32> -> vector<8x32xf32>
    %229 = vector.broadcast %9 : vector<1x32xf32> to vector<8x32xf32>
    %230 = arith.addf %228, %229 : vector<8x32xf32>
    %231 = arith.addf %199, %230 : vector<8x32xf32>
    %c0_56 = arith.constant 0 : index
    %c0_57 = arith.constant 0 : index
    %232 = vector.load %arg8[%c0_56, %c0_57] : memref<8x32xf32, #tpu.memory_space<vmem>>, vector<8x32xf32>
    tpu.vector_store %arg8[%c0_56, %c0_57], %231 {strides = array<i32>} : memref<8x32xf32, #tpu.memory_space<vmem>>, vector<8x32xf32>,
    return
  }
  func.func @transform_0(%arg0: i32) -> (i32, i32) {
    %c0_i32 = arith.constant 0 : i32
    %c0_i32_0 = arith.constant 0 : i32
    return %arg0, %c0_i32 : i32, i32
  }
  func.func @transform_1(%arg0: i32) -> (i32, i32) {
    %c0_i32 = arith.constant 0 : i32
    %c0_i32_0 = arith.constant 0 : i32
    return %arg0, %c0_i32 : i32, i32
  }
  func.func @transform_2(%arg0: i32) -> (i32, i32, i32) {
    %c0_i32 = arith.constant 0 : i32
    %c0_i32_0 = arith.constant 0 : i32
    %c0_i32_1 = arith.constant 0 : i32
    return %arg0, %c0_i32, %c0_i32_0 : i32, i32, i32
  }
  func.func @transform_3(%arg0: i32) -> (i32, i32, i32) {
    %c0_i32 = arith.constant 0 : i32
    %c0_i32_0 = arith.constant 0 : i32
    %c0_i32_1 = arith.constant 0 : i32
    return %arg0, %c0_i32, %c0_i32_0 : i32, i32, i32
  }
  func.func @transform_4(%arg0: i32) -> (i32, i32) {
    %c0_i32 = arith.constant 0 : i32
    %c0_i32_0 = arith.constant 0 : i32
    %c0_i32_1 = arith.constant 0 : i32
    return %c0_i32, %c0_i32_0 : i32, i32
  }
  func.func @transform_5(%arg0: i32) -> (i32, i32) {
    %c0_i32 = arith.constant 0 : i32
    %c0_i32_0 = arith.constant 0 : i32
    %c0_i32_1 = arith.constant 0 : i32
    return %c0_i32, %c0_i32_0 : i32, i32
  }
  func.func @transform_6(%arg0: i32) -> (i32, i32) {
    %c0_i32 = arith.constant 0 : i32
    %c0_i32_0 = arith.constant 0 : i32
    %c0_i32_1 = arith.constant 0 : i32
    return %c0_i32, %c0_i32_0 : i32, i32
  }
  func.func @transform_7(%arg0: i32) -> (i32, i32) {
    %c0_i32 = arith.constant 0 : i32
    %c0_i32_0 = arith.constant 0 : i32
    return %arg0, %c0_i32 : i32, i32
  }
}

</mosaic_0001>

<llo_original>
// kernel: tpu_custom_call.1
$region0: #{tpu_custom_call.1}
  #allocation0 [shape = 'u32[]', space=smem, size = 0x4, offset = 0x4, fixed_abs, tag = 'smem constant byte address 0x4 - core index']
  #allocation1 [shape = 'u32[144,128]{1,0:T(1,128)}', space=vmem, size = 0x12000, scoped, tag = 'internal scratch']
  %s0 = inlined_call_operand.hbm [shape: f32[16,32], index: 0, kind: input, shape index: {}]
  %s1 = inlined_call_operand.hbm [shape: f32[16,32], index: 1, kind: input, shape index: {}]
  %s2 = inlined_call_operand.hbm [shape: f32[2,8,8], index: 2, kind: input, shape index: {}]
  %s3 = inlined_call_operand.hbm [shape: f32[2,8,8], index: 3, kind: input, shape index: {}]
  %s4 = inlined_call_operand.vmem [shape: bf16[32,320], index: 4, kind: input, shape index: {}]
  %s5 = inlined_call_operand.vmem [shape: bf16[64,32], index: 5, kind: input, shape index: {}]
  %s6 = inlined_call_operand.hbm [shape: f32[8,64], index: 6, kind: input, shape index: {}]
  %s7 = inlined_call_operand.hbm [shape: f32[16,32], index: 7, kind: output, shape index: {}]
  %s8 = sld [smem:[#allocation0]]
  $region81: #{tpu_custom_call.1} parent=0
    _
  %s10 = ssub.s32 1, %s8
  %s11 = scalar_select 0, %s10, %s8
  $region1: #{tpu_custom_call.1} parent=0
    #allocation2 [shape = 'u8[8192]{0}', space=vmem, size = 0x2000, scoped, tag = 'input window, operand 0']
    #allocation3 [shape = 's32[2]{0}', space=sflag, size = 0x8, scoped, tag = 'scoped memory for tpu_custom_call.1']
    #allocation4 [shape = 's32[2]{0}', space=sflag, size = 0x8, scoped, tag = 'scoped memory for tpu_custom_call.1']
    #allocation5 [shape = 'u8[8192]{0}', space=vmem, size = 0x2000, scoped, tag = 'input window, operand 1']
    #allocation6 [shape = 's32[2]{0}', space=sflag, size = 0x8, scoped, tag = 'scoped memory for tpu_custom_call.1']
    #allocation7 [shape = 'u8[8192]{0}', space=vmem, size = 0x2000, scoped, tag = 'input window, operand 2']
    #allocation8 [shape = 'u8[8192]{0}', space=vmem, size = 0x2000, scoped, tag = 'input window, operand 3']
    #allocation9 [shape = 's32[2]{0}', space=sflag, size = 0x8, scoped, tag = 'scoped memory for tpu_custom_call.1']
    #allocation10 [shape = 'u8[4096]{0}', space=vmem, size = 0x1000, scoped, tag = 'input window, operand 6, single buffered']
    #allocation11 [shape = 'u8[8192]{0}', space=vmem, size = 0x2000, scoped, tag = 'output window, operand 0']
    %12 = vsyncpa [#allocation3], 0
    %s13 = scalar_lea.sflag [#allocation3], 1
    %14 = vsyncpa %s13, 0
    %15 = vsyncpa [#allocation6], 0
    %s16 = scalar_lea.sflag [#allocation6], 1
    %17 = vsyncpa %s16, 0
    %18 = vsyncpa [#allocation9], 0
    %s19 = scalar_lea.sflag [#allocation9], 1
    %20 = vsyncpa %s19, 0
    %21 = vsyncpa [#allocation4], 0
    %s22 = scalar_lea.sflag [#allocation4], 1
    %23 = vsyncpa %s22, 0
    loop: start=0, step=1, limit=4
    $region2: #{tpu_custom_call.1} parent=1 // loop_pre_header
      _
    $region3: #{tpu_custom_call.1} parent=1 // loop_header
      %s25 = sphi 0, %s29
      %p26 = scmp.ge.s32.totalorder %s25, 4
      %s35 = sphi 0, %s37
      %s38 = sphi 0, %s35
      %s39 = sphi 0, %s38
      %s55 = sphi 0, %s39
      %s61 = sphi 0, %s63
      %s64 = sphi 0, %s61
      %s65 = sphi 0, %s64
      %s81 = sphi 0, %s65
      %s87 = sphi 0, %s89
      %s90 = sphi 0, %s87
      %s91 = sphi 0, %s90
      %s107 = sphi 0, %s91
      %s113 = sphi 0, %s115
      %s116 = sphi 0, %s113
      %s117 = sphi 0, %s116
      %s133 = sphi 0, %s117
      %s137 = sphi 0, %s137
      %s139 = sphi 0, %s137
      %s140 = sphi 0, %s139
      %s154 = sphi 0, %s140
      %s158 = sphi 0, %s158
      %s160 = sphi 0, %s158
      %s161 = sphi 0, %s160
      %s175 = sphi 0, %s161
      %s179 = sphi 0, %s179
      %s181 = sphi 0, %s179
      %s182 = sphi 0, %s181
      %s196 = sphi 0, %s182
      %s202 = sphi 0, %s204
      %s205 = sphi 0, %s202
      %s206 = sphi 0, %s205
      %s222 = sphi 0, %s206
    $region4: #{tpu_custom_call.1} parent=1 // loop_header_branch
      %28 = sbr.rel (%p26) target = $region8
    $region5: #{tpu_custom_call.1} parent=1 // loop_body
      %s30 = ssub.s32 %s25, 1
      %s31 = ssub.s32 %s25, 2
      %s32 = sadd.s32 %s25, 1
      %s33 = ssub.s32 %s25, %s32
      %p34 = scmp.eq.s32.totalorder %s33, 0
      %s36 = sadd.s32 %s35, 1
      %s37 = scalar_select %p34, %s35, %s36
      %p40 = pneg %p34
      %p41 = scmp.eq.s32.totalorder %s25, 1
      %p42 = por %p40, %p41
      %p43 = scmp.ne.s32.totalorder %s35, %s38
      %p44 = scmp.eq.s32.totalorder %s25, 0
      %p45 = por %p43, %p44
      %p46 = scmp.ne.s32.totalorder %s35, %s38
      %p47 = scmp.eq.s32.totalorder %s30, 1
      %p48 = por %p46, %p47
      %p49 = scmp.ne.s32.totalorder %s38, %s39
      %p50 = scmp.eq.s32.totalorder %s30, 0
      %p51 = por %p49, %p50
      %p52 = scmp.ne.s32.totalorder %s38, %s39
      %p53 = scmp.eq.s32.totalorder %s31, 1
      %p54 = por %p52, %p53
      %p56 = scmp.ne.s32.totalorder %s39, %s55
      %p57 = scmp.eq.s32.totalorder %s31, 0
      %p58 = por %p56, %p57
      %s59 = ssub.s32 %s25, %s32
      %p60 = scmp.eq.s32.totalorder %s59, 0
      %s62 = sadd.s32 %s61, 1
      %s63 = scalar_select %p60, %s61, %s62
      %p66 = pneg %p60
      %p67 = scmp.eq.s32.totalorder %s25, 1
      %p68 = por %p66, %p67
      %p69 = scmp.ne.s32.totalorder %s61, %s64
      %p70 = scmp.eq.s32.totalorder %s25, 0
      %p71 = por %p69, %p70
      %p72 = scmp.ne.s32.totalorder %s61, %s64
      %p73 = scmp.eq.s32.totalorder %s30, 1
      %p74 = por %p72, %p73
      %p75 = scmp.ne.s32.totalorder %s64, %s65
      %p76 = scmp.eq.s32.totalorder %s30, 0
      %p77 = por %p75, %p76
      %p78 = scmp.ne.s32.totalorder %s64, %s65
      %p79 = scmp.eq.s32.totalorder %s31, 1
      %p80 = por %p78, %p79
      %p82 = scmp.ne.s32.totalorder %s65, %s81
      %p83 = scmp.eq.s32.totalorder %s31, 0
      %p84 = por %p82, %p83
      %s85 = ssub.s32 %s25, %s32
      %p86 = scmp.eq.s32.totalorder %s85, 0
      %s88 = sadd.s32 %s87, 1
      %s89 = scalar_select %p86, %s87, %s88
      %p92 = pneg %p86
      %p93 = scmp.eq.s32.totalorder %s25, 1
      %p94 = por %p92, %p93
      %p95 = scmp.ne.s32.totalorder %s87, %s90
      %p96 = scmp.eq.s32.totalorder %s25, 0
      %p97 = por %p95, %p96
      %p98 = scmp.ne.s32.totalorder %s87, %s90
      %p99 = scmp.eq.s32.totalorder %s30, 1
      %p100 = por %p98, %p99
      %p101 = scmp.ne.s32.totalorder %s90, %s91
      %p102 = scmp.eq.s32.totalorder %s30, 0
      %p103 = por %p101, %p102
      %p104 = scmp.ne.s32.totalorder %s90, %s91
      %p105 = scmp.eq.s32.totalorder %s31, 1
      %p106 = por %p104, %p105
      %p108 = scmp.ne.s32.totalorder %s91, %s107
      %p109 = scmp.eq.s32.totalorder %s31, 0
      %p110 = por %p108, %p109
      %s111 = ssub.s32 %s25, %s32
      %p112 = scmp.eq.s32.totalorder %s111, 0
      %s114 = sadd.s32 %s113, 1
      %s115 = scalar_select %p112, %s113, %s114
      %p118 = pneg %p112
      %p119 = scmp.eq.s32.totalorder %s25, 1
      %p120 = por %p118, %p119
      %p121 = scmp.ne.s32.totalorder %s113, %s116
      %p122 = scmp.eq.s32.totalorder %s25, 0
      %p123 = por %p121, %p122
      %p124 = scmp.ne.s32.totalorder %s113, %s116
      %p125 = scmp.eq.s32.totalorder %s30, 1
      %p126 = por %p124, %p125
      %p127 = scmp.ne.s32.totalorder %s116, %s117
      %p128 = scmp.eq.s32.totalorder %s30, 0
      %p129 = por %p127, %p128
      %p130 = scmp.ne.s32.totalorder %s116, %s117
      %p131 = scmp.eq.s32.totalorder %s31, 1
      %p132 = por %p130, %p131
      %p134 = scmp.ne.s32.totalorder %s117, %s133
      %p135 = scmp.eq.s32.totalorder %s31, 0
      %p136 = por %p134, %p135
      %s138 = sadd.s32 %s137, 1
      %p141 = scmp.eq.s32.totalorder %s25, 1
      %p142 = scmp.ne.s32.totalorder %s137, %s139
      %p143 = scmp.eq.s32.totalorder %s25, 0
      %p144 = por %p142, %p143
      %p145 = scmp.ne.s32.totalorder %s137, %s139
      %p146 = scmp.eq.s32.totalorder %s30, 1
      %p147 = por %p145, %p146
      %p148 = scmp.ne.s32.totalorder %s139, %s140
      %p149 = scmp.eq.s32.totalorder %s30, 0
      %p150 = por %p148, %p149
      %p151 = scmp.ne.s32.totalorder %s139, %s140
      %p152 = scmp.eq.s32.totalorder %s31, 1
      %p153 = por %p151, %p152
      %p155 = scmp.ne.s32.totalorder %s140, %s154
      %p156 = scmp.eq.s32.totalorder %s31, 0
      %p157 = por %p155, %p156
      %s159 = sadd.s32 %s158, 1
      %p162 = scmp.eq.s32.totalorder %s25, 1
      %p163 = scmp.ne.s32.totalorder %s158, %s160
      %p164 = scmp.eq.s32.totalorder %s25, 0
      %p165 = por %p163, %p164
      %p166 = scmp.ne.s32.totalorder %s158, %s160
      %p167 = scmp.eq.s32.totalorder %s30, 1
      %p168 = por %p166, %p167
      %p169 = scmp.ne.s32.totalorder %s160, %s161
      %p170 = scmp.eq.s32.totalorder %s30, 0
      %p171 = por %p169, %p170
      %p172 = scmp.ne.s32.totalorder %s160, %s161
      %p173 = scmp.eq.s32.totalorder %s31, 1
      %p174 = por %p172, %p173
      %p176 = scmp.ne.s32.totalorder %s161, %s175
      %p177 = scmp.eq.s32.totalorder %s31, 0
      %p178 = por %p176, %p177
      %s180 = sadd.s32 %s179, 1
      %p183 = scmp.eq.s32.totalorder %s25, 1
      %p184 = scmp.ne.s32.totalorder %s179, %s181
      %p185 = scmp.eq.s32.totalorder %s25, 0
      %p186 = por %p184, %p185
      %p187 = scmp.ne.s32.totalorder %s179, %s181
      %p188 = scmp.eq.s32.totalorder %s30, 1
      %p189 = por %p187, %p188
      %p190 = scmp.ne.s32.totalorder %s181, %s182
      %p191 = scmp.eq.s32.totalorder %s30, 0
      %p192 = por %p190, %p191
      %p193 = scmp.ne.s32.totalorder %s181, %s182
      %p194 = scmp.eq.s32.totalorder %s31, 1
      %p195 = por %p193, %p194
      %p197 = scmp.ne.s32.totalorder %s182, %s196
      %p198 = scmp.eq.s32.totalorder %s31, 0
      %p199 = por %p197, %p198
      %s200 = ssub.s32 %s25, %s32
      %p201 = scmp.eq.s32.totalorder %s200, 0
      %s203 = sadd.s32 %s202, 1
      %s204 = scalar_select %p201, %s202, %s203
      %p207 = pneg %p201
      %p208 = scmp.eq.s32.totalorder %s25, 1
      %p209 = por %p207, %p208
      %p210 = scmp.ne.s32.totalorder %s202, %s205
      %p211 = scmp.eq.s32.totalorder %s25, 0
      %p212 = por %p210, %p211
      %p213 = scmp.ne.s32.totalorder %s202, %s205
      %p214 = scmp.eq.s32.totalorder %s30, 1
      %p215 = por %p213, %p214
      %p216 = scmp.ne.s32.totalorder %s205, %s206
      %p217 = scmp.eq.s32.totalorder %s30, 0
      %p218 = por %p216, %p217
      %p219 = scmp.ne.s32.totalorder %s205, %s206
      %p220 = scmp.eq.s32.totalorder %s31, 1
      %p221 = por %p219, %p220
      %p223 = scmp.ne.s32.totalorder %s206, %s222
      %p224 = scmp.eq.s32.totalorder %s31, 0
      %p225 = por %p223, %p224
      %p226 = scmp.le.s32.totalorder 1, %s25
      %p227 = scmp.lt.s32.totalorder %s25, 3
      %p228 = pnand %p226, %p227
      %p229 = pneg %p228
      // Predicated region
      $region9: #{tpu_custom_call.1} parent=5 // pred_check
        _
      $region10: #{tpu_custom_call.1} parent=5 // pred_check_branch
        %231 = sbr.rel (%p228) target = $region12
      $region11: #{tpu_custom_call.1} parent=5 // pred_region
        %s232 = ssub.s32 %s25, 1
        // Predicated region
        $region13: #{tpu_custom_call.1} parent=11 // pred_check
          %p233 = pneg %p150
        $region14: #{tpu_custom_call.1} parent=11 // pred_check_branch
          %235 = sbr.rel (%p233) target = $region16
        $region15: #{tpu_custom_call.1} parent=11 // pred_region
          _
        $region16: #{tpu_custom_call.1} parent=11 // pred_fallthru
          _
        // Predicated region
        $region17: #{tpu_custom_call.1} parent=11 // pred_check
          %p236 = pneg %p171
        $region18: #{tpu_custom_call.1} parent=11 // pred_check_branch
          %238 = sbr.rel (%p236) target = $region20
        $region19: #{tpu_custom_call.1} parent=11 // pred_region
          _
        $region20: #{tpu_custom_call.1} parent=11 // pred_fallthru
          _
        // Predicated region
        $region21: #{tpu_custom_call.1} parent=11 // pred_check
          %p239 = pneg %p192
        $region22: #{tpu_custom_call.1} parent=11 // pred_check_branch
          %241 = sbr.rel (%p239) target = $region24
        $region23: #{tpu_custom_call.1} parent=11 // pred_region
          %s243 = ssub.s32 128, 128
          %244 = vsyncadd [#allocation9], %s243
          %s246 = sshll.u32 [#allocation10], 4
          %s247 = int_to_ptr.vmem [resolvable:$true] %s246
          %249 = dma.hbm_to_vmem [thread:$0]  %s6, 128, %s247, [#allocation9]
        $region24: #{tpu_custom_call.1} parent=11 // pred_fallthru
          _
      $region12: #{tpu_custom_call.1} parent=5 // pred_fallthru
        _
      %p250 = scmp.lt.s32.totalorder %s25, 2
      // Predicated region
      $region25: #{tpu_custom_call.1} parent=5 // pred_check
        %p251 = pneg %p250
      $region26: #{tpu_custom_call.1} parent=5 // pred_check_branch
        %253 = sbr.rel (%p251) target = $region28
      $region27: #{tpu_custom_call.1} parent=5 // pred_region
        // Predicated region
        $region29: #{tpu_custom_call.1} parent=27 // pred_check
          %p254 = pneg %p45
        $region30: #{tpu_custom_call.1} parent=27 // pred_check_branch
          %256 = sbr.rel (%p254) target = $region32
        $region31: #{tpu_custom_call.1} parent=27 // pred_region
          %s257 = sand.u32 %s35, 1
          %s258 = scalar_lea.sflag [#allocation3], %s257
          %s259 = sand.u32 %s35, 1
          %s260 = smul.addr %s259, 8
          %s261 = scalar_lea.vmem [#allocation2], %s260
          %s263 = ssub.s32 128, 128
          %264 = vsyncadd %s258, %s263
          %s265 = smul.addr %s25, 128
          %s266 = scalar_lea.hbm %s0, %s265
          %s268 = sshll.u32 %s261, 4
          %s269 = int_to_ptr.vmem [resolvable:$true] %s268
          %271 = dma.hbm_to_vmem [thread:$0]  %s266, 128, %s269, %s258
        $region32: #{tpu_custom_call.1} parent=27 // pred_fallthru
          _
        // Predicated region
        $region33: #{tpu_custom_call.1} parent=27 // pred_check
          %p272 = pneg %p71
        $region34: #{tpu_custom_call.1} parent=27 // pred_check_branch
          %274 = sbr.rel (%p272) target = $region36
        $region35: #{tpu_custom_call.1} parent=27 // pred_region
          %s275 = sand.u32 %s25, 1
          %s276 = scalar_lea.sflag [#allocation6], %s275
          %s277 = sand.u32 %s61, 1
          %s278 = smul.addr %s277, 8
          %s279 = scalar_lea.vmem [#allocation5], %s278
          %s281 = ssub.s32 128, 128
          %282 = vsyncadd %s276, %s281
          %s283 = smul.addr %s25, 128
          %s284 = scalar_lea.hbm %s1, %s283
          %s286 = sshll.u32 %s279, 4
          %s287 = int_to_ptr.vmem [resolvable:$true] %s286
          %289 = dma.hbm_to_vmem [thread:$0]  %s284, 128, %s287, %s276
        $region36: #{tpu_custom_call.1} parent=27 // pred_fallthru
          _
        // Predicated region
        $region37: #{tpu_custom_call.1} parent=27 // pred_check
          %p290 = pneg %p97
        $region38: #{tpu_custom_call.1} parent=27 // pred_check_branch
          %292 = sbr.rel (%p290) target = $region40
        $region39: #{tpu_custom_call.1} parent=27 // pred_region
          %s293 = sand.u32 %s25, 1
          %s294 = scalar_lea.sflag [#allocation6], %s293
          %s295 = sand.u32 %s87, 1
          %s296 = smul.addr %s295, 8
          %s297 = scalar_lea.vmem [#allocation7], %s296
          %s299 = ssub.s32 128, 128
          %300 = vsyncadd %s294, %s299
          %s301 = smul.addr %s25, 128
          %s302 = scalar_lea.hbm %s2, %s301
          %s304 = sshll.u32 %s297, 4
          %s305 = int_to_ptr.vmem [resolvable:$true] %s304
          %307 = dma.hbm_to_vmem [thread:$0]  %s302, 128, %s305, %s294
        $region40: #{tpu_custom_call.1} parent=27 // pred_fallthru
          _
        // Predicated region
        $region41: #{tpu_custom_call.1} parent=27 // pred_check
          %p308 = pneg %p123
        $region42: #{tpu_custom_call.1} parent=27 // pred_check_branch
          %310 = sbr.rel (%p308) target = $region44
        $region43: #{tpu_custom_call.1} parent=27 // pred_region
          %s311 = sand.u32 %s25, 1
          %s312 = scalar_lea.sflag [#allocation9], %s311
          %s313 = sand.u32 %s113, 1
          %s314 = smul.addr %s313, 8
          %s315 = scalar_lea.vmem [#allocation8], %s314
          %s317 = ssub.s32 128, 128
          %318 = vsyncadd %s312, %s317
          %s319 = smul.addr %s25, 128
          %s320 = scalar_lea.hbm %s3, %s319
          %s322 = sshll.u32 %s315, 4
          %s323 = int_to_ptr.vmem [resolvable:$true] %s322
          %325 = dma.hbm_to_vmem [thread:$0]  %s320, 128, %s323, %s312
        $region44: #{tpu_custom_call.1} parent=27 // pred_fallthru
          _
      $region28: #{tpu_custom_call.1} parent=5 // pred_fallthru
        _
      %p326 = scmp.le.s32.totalorder 1, %s25
      %p327 = scmp.lt.s32.totalorder %s25, 3
      %p328 = pnand %p326, %p327
      %p329 = pneg %p328
      // Predicated region
      $region45: #{tpu_custom_call.1} parent=5 // pred_check
        _
      $region46: #{tpu_custom_call.1} parent=5 // pred_check_branch
        %331 = sbr.rel (%p328) target = $region48
      $region47: #{tpu_custom_call.1} parent=5 // pred_region
        %s332 = ssub.s32 %s25, 1
        %s333 = sand.u32 %s38, 1
        %s334 = scalar_lea.sflag [#allocation3], %s333
        %s335 = sand.u32 %s38, 1
        %s336 = smul.addr %s335, 8
        %s337 = scalar_lea.vmem [#allocation2], %s336
        // Predicated region
        $region49: #{tpu_custom_call.1} parent=47 // pred_check
          %p338 = pneg %p51
        $region50: #{tpu_custom_call.1} parent=47 // pred_check_branch
          %340 = sbr.rel (%p338) target = $region52
        $region51: #{tpu_custom_call.1} parent=47 // pred_region
          %341 = dma.done %s334, 128
        $region52: #{tpu_custom_call.1} parent=47 // pred_fallthru
          _
        %s342 = sand.u32 %s30, 1
        %s343 = scalar_lea.sflag [#allocation6], %s342
        %s344 = sand.u32 %s64, 1
        %s345 = smul.addr %s344, 8
        %s346 = scalar_lea.vmem [#allocation5], %s345
        // Predicated region
        $region53: #{tpu_custom_call.1} parent=47 // pred_check
          %p347 = pneg %p77
        $region54: #{tpu_custom_call.1} parent=47 // pred_check_branch
          %349 = sbr.rel (%p347) target = $region56
        $region55: #{tpu_custom_call.1} parent=47 // pred_region
          %350 = dma.done %s343, 128
        $region56: #{tpu_custom_call.1} parent=47 // pred_fallthru
          _
        %s351 = sand.u32 %s30, 1
        %s352 = scalar_lea.sflag [#allocation6], %s351
        %s353 = sand.u32 %s90, 1
        %s354 = smul.addr %s353, 8
        %s355 = scalar_lea.vmem [#allocation7], %s354
        // Predicated region
        $region57: #{tpu_custom_call.1} parent=47 // pred_check
          %p356 = pneg %p103
        $region58: #{tpu_custom_call.1} parent=47 // pred_check_branch
          %358 = sbr.rel (%p356) target = $region60
        $region59: #{tpu_custom_call.1} parent=47 // pred_region
          %359 = dma.done %s352, 128
        $region60: #{tpu_custom_call.1} parent=47 // pred_fallthru
          _
        %s360 = sand.u32 %s30, 1
        %s361 = scalar_lea.sflag [#allocation9], %s360
        %s362 = sand.u32 %s116, 1
        %s363 = smul.addr %s362, 8
        %s364 = scalar_lea.vmem [#allocation8], %s363
        // Predicated region
        $region61: #{tpu_custom_call.1} parent=47 // pred_check
          %p365 = pneg %p129
        $region62: #{tpu_custom_call.1} parent=47 // pred_check_branch
          %367 = sbr.rel (%p365) target = $region64
        $region63: #{tpu_custom_call.1} parent=47 // pred_region
          %368 = dma.done %s361, 128
        $region64: #{tpu_custom_call.1} parent=47 // pred_fallthru
          _
        // Predicated region
        $region65: #{tpu_custom_call.1} parent=47 // pred_check
          %p369 = pneg %p192
        $region66: #{tpu_custom_call.1} parent=47 // pred_check_branch
          %371 = sbr.rel (%p369) target = $region68
        $region67: #{tpu_custom_call.1} parent=47 // pred_region
          %372 = dma.done [#allocation9], 128
        $region68: #{tpu_custom_call.1} parent=47 // pred_fallthru
          _
        %s373 = sand.u32 %s38, 1
        %s374 = scalar_lea.sflag [#allocation3], %s373
        %s375 = sand.u32 %s38, 1
        %s376 = smul.addr %s375, 8
        %s377 = scalar_lea.vmem [#allocation2], %s376
        %p378 = pneg %p51
        %p379 = pneg %p48
        %s380 = sand.u32 %s30, 1
        %s381 = scalar_lea.sflag [#allocation6], %s380
        %s382 = sand.u32 %s64, 1
        %s383 = smul.addr %s382, 8
        %s384 = scalar_lea.vmem [#allocation5], %s383
        %p385 = pneg %p77
        %p386 = pneg %p74
        %s387 = sand.u32 %s30, 1
        %s388 = scalar_lea.sflag [#allocation6], %s387
        %s389 = sand.u32 %s90, 1
        %s390 = smul.addr %s389, 8
        %s391 = scalar_lea.vmem [#allocation7], %s390
        %p392 = pneg %p103
        %p393 = pneg %p100
        %s394 = sand.u32 %s30, 1
        %s395 = scalar_lea.sflag [#allocation9], %s394
        %s396 = sand.u32 %s116, 1
        %s397 = smul.addr %s396, 8
        %s398 = scalar_lea.vmem [#allocation8], %s397
        %p399 = pneg %p129
        %p400 = pneg %p126
        %p401 = pneg %p150
        %p402 = pneg %p147
        %p403 = pneg %p171
        %p404 = pneg %p168
        %p405 = pneg %p192
        %p406 = pneg %p189
        %p407 = pneg %p218
        %p408 = pneg %p215
        %s409 = sand.u32 %s205, 1
        %s410 = scalar_lea.sflag [#allocation4], %s409
        %s411 = sand.u32 %s205, 1
        %s412 = smul.addr %s411, 8
        %s413 = scalar_lea.vmem [#allocation11], %s412
        %v415 = vld [vmem:[%s337] sm:$0xff]
        %v416 = vld [vmem:[%s346] sm:$0xff]
        %v417 = vld [vmem:[#allocation10] sm:$0xff]
        %v418 = vld [vmem:[%s4] sm:$0xf]
        %v419 = vld [vmem:[%s4 + $0xc] sm:$0xf]
        %v420 = vld [vmem:[%s4 + $0x18] sm:$0xf]
        %v421 = vld [vmem:[%s4 + $0x24] sm:$0xf]
        %v422 = vld [vmem:[%s4 + $0x4] sm:$0xf]
        %v423 = vld [vmem:[%s4 + $0x10] sm:$0xf]
        %v424 = vld [vmem:[%s4 + $0x1c] sm:$0xf]
        %v425 = vld [vmem:[%s4 + $0x28] sm:$0xf]
        %v426 = vld [vmem:[%s4 + $0x8] sm:$0xf]
        %v427 = vld [vmem:[%s4 + $0x14] sm:$0xf]
        %v428 = vld [vmem:[%s4 + $0x20] sm:$0xf]
        %v429 = vld [vmem:[%s4 + $0x2c] sm:$0xf]
        %v430 = vld [vmem:[%s5] sm:$0xf]
        %v431 = vld [vmem:[%s5 + $0x4] sm:$0xf]
        %v432 = vld [vmem:[%s5 + $0x8] sm:$0xf]
        %v433 = vld [vmem:[%s5 + $0xc] sm:$0xf]
        %v434 = vld [vmem:[%s5 + $0x10] sm:$0xf]
        %v435 = vld [vmem:[%s5 + $0x14] sm:$0xf]
        %v436 = vld [vmem:[%s5 + $0x18] sm:$0xf]
        %v437 = vld [vmem:[%s5 + $0x1c] sm:$0xf]
        %v438 = vld [vmem:[%s355] sm:$0xff]
        %vm439 = vcmp.eq.f32.partialorder %v438, 0.0
        %v440 = vld [vmem:[%s364] sm:$0xff]
        %vm441 = vcmp.eq.f32.partialorder %v440, 0.0
        %vm442 = vcmask 261120
        %v443 = vsel %vm442, %v415, 0.0
        %444 = vadd.xlane.f32.xlu0 %v443
        %v445 = vpop.xlane.xlu0 %444
        %v446 = vrcp.pop 32.0
        %v447 = vmul.f32 %v445, %v446
        %v448 = vsub.f32 %v415, %v447
        %v449 = vmul.f32 %v448, %v448
        %v450 = vsel %vm442, %v449, 0.0
        %451 = vadd.xlane.f32.xlu0 %v450
        %v452 = vpop.xlane.xlu0 %451
        %v453 = vmul.f32 %v452, 0.032258064
        %v454 = vrsqrt.pop %v453
        %v455 = vmul.f32 %v453, %v454
        %vm456 = vcmp.eq.f32.partialorder %v453, inf
        %v457 = vsel %vm456, %v453, %v455
        %vm458 = vcmp.eq.f32.partialorder %v453, 0.0
        %v459 = vand.u32 %v453, 2147483648
        %v460 = vsel %vm458, %v459, %v457
        %v461 = vadd.f32 %v460, 1e-06
        %v462 = vrcp.pop %v461
        %v463 = vmul.f32 %v448, %v462
        %v464 = vlaneseq
        %v465 = vshrl.u32 %v464, 7
        %v466 = vsub.s32 0, %v465
        %v467 = vrot.slane %v417, %v466
        %v468 = vmul.f32 %v467, %v463
        %v469 = vlaneseq
        %v470 = vshrl.u32 %v469, 7
        %v471 = vsub.s32 1, %v470
        %v472 = vrot.slane %v417, %v471
        %v473 = vadd.f32 %v468, %v472
        %v474 = vpack.c.bf16 %v473, %v473
        %v479 = vunpack.c.l.b16 %v418
        %v480 = vunpack.c.l.b16 %v419
        %v481 = vunpack.c.l.b16 %v420
        %v482 = vunpack.c.l.b16 %v421
        %v483 = vpack.c.b16 %v480, %v479
        %v484 = vpack.c.b16 %v482, %v481
        %v488 = vsel %vm442, %v474, 0
        %490 = vmatprep.subr.bf16.mxu0 0
        %491 = vmatpush1.bf16.msra.mxu0 %v483
        %492 = vmatprep.subr.bf16.mxu0 0
        %493 = vmatpush1.bf16.msra.mxu0 %v484
        %494 = vmatprep.subr.bf16.mxu0 0
        %495 = vmatpush1.bf16.msra.mxu0 0
        %496 = vmatprep.subr.bf16.mxu0 0
        %497 = vmatpush1.bf16.msra.mxu0 0
        %498 = vmatprep.subr.bf16.mxu0 0
        %499 = vmatpush1.bf16.msra.mxu0 0
        %500 = vmatprep.subr.bf16.mxu0 0
        %501 = vmatpush1.bf16.msra.mxu0 0
        %502 = vmatprep.subr.bf16.mxu0 0
        %503 = vmatpush1.bf16.msra.mxu0 0
        %504 = vmatprep.subr.bf16.mxu0 0
        %505 = vmatpush1.bf16.msra.mxu0 0
        %506 = vmatprep.subr.bf16.mxu0 0
        %507 = vmatpush1.bf16.msra.mxu0 0
        %508 = vmatprep.subr.bf16.mxu0 0
        %509 = vmatpush1.bf16.msra.mxu0 0
        %510 = vmatprep.subr.bf16.mxu0 0
        %511 = vmatpush1.bf16.msra.mxu0 0
        %512 = vmatprep.subr.bf16.mxu0 0
        %513 = vmatpush1.bf16.msra.mxu0 0
        %514 = vmatprep.subr.bf16.mxu0 0
        %515 = vmatpush1.bf16.msra.mxu0 0
        %516 = vmatprep.subr.bf16.mxu0 0
        %517 = vmatpush1.bf16.msra.mxu0 0
        %518 = vmatprep.subr.bf16.mxu0 0
        %519 = vmatpush1.bf16.msra.mxu0 0
        %520 = vmatprep.subr.bf16.mxu0 0
        %521 = vmatpush1.bf16.msra.mxu0 0
        %522 = vmatprep.mubr.bf16.mxu0 0
        %523 = vmatmul.mubr.bf16.gmra.mrb[0].mxu0 %v488
        %v524 = vpop.f32.mrb[0].mxu0
        %v525 = vadd.f32 0.0, %v524
        %v526 = vpop.f32.mrb[0].mxu0
        %v527 = vpop.f32.mrb[0].mxu0
        %v528 = vpop.f32.mrb[0].mxu0
        %529 = vdwg.mxu0
        %v530 = vpack.c.bf16 %v525, %v525
        %532 = vrot.lane.b32.xlu0 %v530, 120
        %v533 = vpop.permute.xlu0 %532
        %534 = vrot.lane.b32.xlu0 %v530, 112
        %v535 = vpop.permute.xlu0 %534
        %536 = vrot.lane.b32.xlu0 %v530, 104
        %v537 = vpop.permute.xlu0 %536
        %538 = vrot.lane.b32.xlu0 %v530, 96
        %v539 = vpop.permute.xlu0 %538
        %vm540 = vcmask 64512
        %v542 = vsel %vm540, %v530, 0
        %v545 = vsel %vm540, %v539, 0
        %547 = vmatprep.subr.bf16.mxu0 0
        %548 = vmatpush1.bf16.xpose.msra.mxu0 %v545
        %549 = vmatprep.subr.bf16.mxu0 0
        %550 = vmatpush1.bf16.xpose.msra.mxu0 0
        %551 = vmatprep.subr.bf16.mxu0 0
        %552 = vmatpush1.bf16.xpose.msra.mxu0 0
        %553 = vmatprep.subr.bf16.mxu0 0
        %554 = vmatpush1.bf16.xpose.msra.mxu0 0
        %555 = vmatprep.subr.bf16.mxu0 0
        %556 = vmatpush1.bf16.xpose.msra.mxu0 0
        %557 = vmatprep.subr.bf16.mxu0 0
        %558 = vmatpush1.bf16.xpose.msra.mxu0 0
        %559 = vmatprep.subr.bf16.mxu0 0
        %560 = vmatpush1.bf16.xpose.msra.mxu0 0
        %561 = vmatprep.subr.bf16.mxu0 0
        %562 = vmatpush1.bf16.xpose.msra.mxu0 0
        %563 = vmatprep.subr.bf16.mxu0 0
        %564 = vmatpush1.bf16.xpose.msra.mxu0 0
        %565 = vmatprep.subr.bf16.mxu0 0
        %566 = vmatpush1.bf16.xpose.msra.mxu0 0
        %567 = vmatprep.subr.bf16.mxu0 0
        %568 = vmatpush1.bf16.xpose.msra.mxu0 0
        %569 = vmatprep.subr.bf16.mxu0 0
        %570 = vmatpush1.bf16.xpose.msra.mxu0 0
        %571 = vmatprep.subr.bf16.mxu0 0
        %572 = vmatpush1.bf16.xpose.msra.mxu0 0
        %573 = vmatprep.subr.bf16.mxu0 0
        %574 = vmatpush1.bf16.xpose.msra.mxu0 0
        %575 = vmatprep.subr.bf16.mxu0 0
        %576 = vmatpush1.bf16.xpose.msra.mxu0 0
        %577 = vmatprep.subr.bf16.mxu0 0
        %578 = vmatpush1.bf16.xpose.msra.mxu0 0
        %579 = vmatprep.mubr.bf16.mxu0 0
        %580 = vmatmul.mubr.bf16.gmra.mrb[0].mxu0 %v542
        %v581 = vpop.f32.mrb[0].mxu0
        %v582 = vadd.f32 0.0, %v581
        %v583 = vpop.f32.mrb[0].mxu0
        %v584 = vpop.f32.mrb[0].mxu0
        %v585 = vpop.f32.mrb[0].mxu0
        %586 = vdwg.mxu0
        %587 = vrot.lane.b32.xlu0 %v533, 96
        %v588 = vpop.permute.xlu0 %587
        %v590 = vsel %vm540, %v533, 0
        %v593 = vsel %vm540, %v588, 0
        %595 = vmatprep.subr.bf16.mxu0 0
        %596 = vmatpush1.bf16.xpose.msra.mxu0 %v593
        %597 = vmatprep.subr.bf16.mxu0 0
        %598 = vmatpush1.bf16.xpose.msra.mxu0 0
        %599 = vmatprep.subr.bf16.mxu0 0
        %600 = vmatpush1.bf16.xpose.msra.mxu0 0
        %601 = vmatprep.subr.bf16.mxu0 0
        %602 = vmatpush1.bf16.xpose.msra.mxu0 0
        %603 = vmatprep.subr.bf16.mxu0 0
        %604 = vmatpush1.bf16.xpose.msra.mxu0 0
        %605 = vmatprep.subr.bf16.mxu0 0
        %606 = vmatpush1.bf16.xpose.msra.mxu0 0
        %607 = vmatprep.subr.bf16.mxu0 0
        %608 = vmatpush1.bf16.xpose.msra.mxu0 0
        %609 = vmatprep.subr.bf16.mxu0 0
        %610 = vmatpush1.bf16.xpose.msra.mxu0 0
        %611 = vmatprep.subr.bf16.mxu0 0
        %612 = vmatpush1.bf16.xpose.msra.mxu0 0
        %613 = vmatprep.subr.bf16.mxu0 0
        %614 = vmatpush1.bf16.xpose.msra.mxu0 0
        %615 = vmatprep.subr.bf16.mxu0 0
        %616 = vmatpush1.bf16.xpose.msra.mxu0 0
        %617 = vmatprep.subr.bf16.mxu0 0
        %618 = vmatpush1.bf16.xpose.msra.mxu0 0
        %619 = vmatprep.subr.bf16.mxu0 0
        %620 = vmatpush1.bf16.xpose.msra.mxu0 0
        %621 = vmatprep.subr.bf16.mxu0 0
        %622 = vmatpush1.bf16.xpose.msra.mxu0 0
        %623 = vmatprep.subr.bf16.mxu0 0
        %624 = vmatpush1.bf16.xpose.msra.mxu0 0
        %625 = vmatprep.subr.bf16.mxu0 0
        %626 = vmatpush1.bf16.xpose.msra.mxu0 0
        %627 = vmatprep.mubr.bf16.mxu0 0
        %628 = vmatmul.mubr.bf16.gmra.mrb[0].mxu0 %v590
        %v629 = vpop.f32.mrb[0].mxu0
        %v630 = vadd.f32 0.0, %v629
        %v631 = vpop.f32.mrb[0].mxu0
        %v632 = vpop.f32.mrb[0].mxu0
        %v633 = vpop.f32.mrb[0].mxu0
        %634 = vdwg.mxu0
        %635 = vrot.lane.b32.xlu0 %v535, 96
        %v636 = vpop.permute.xlu0 %635
        %v638 = vsel %vm540, %v535, 0
        %v641 = vsel %vm540, %v636, 0
        %643 = vmatprep.subr.bf16.mxu0 0
        %644 = vmatpush1.bf16.xpose.msra.mxu0 %v641
        %645 = vmatprep.subr.bf16.mxu0 0
        %646 = vmatpush1.bf16.xpose.msra.mxu0 0
        %647 = vmatprep.subr.bf16.mxu0 0
        %648 = vmatpush1.bf16.xpose.msra.mxu0 0
        %649 = vmatprep.subr.bf16.mxu0 0
        %650 = vmatpush1.bf16.xpose.msra.mxu0 0
        %651 = vmatprep.subr.bf16.mxu0 0
        %652 = vmatpush1.bf16.xpose.msra.mxu0 0
        %653 = vmatprep.subr.bf16.mxu0 0
        %654 = vmatpush1.bf16.xpose.msra.mxu0 0
        %655 = vmatprep.subr.bf16.mxu0 0
        %656 = vmatpush1.bf16.xpose.msra.mxu0 0
        %657 = vmatprep.subr.bf16.mxu0 0
        %658 = vmatpush1.bf16.xpose.msra.mxu0 0
        %659 = vmatprep.subr.bf16.mxu0 0
        %660 = vmatpush1.bf16.xpose.msra.mxu0 0
        %661 = vmatprep.subr.bf16.mxu0 0
        %662 = vmatpush1.bf16.xpose.msra.mxu0 0
        %663 = vmatprep.subr.bf16.mxu0 0
        %664 = vmatpush1.bf16.xpose.msra.mxu0 0
        %665 = vmatprep.subr.bf16.mxu0 0
        %666 = vmatpush1.bf16.xpose.msra.mxu0 0
        %667 = vmatprep.subr.bf16.mxu0 0
        %668 = vmatpush1.bf16.xpose.msra.mxu0 0
        %669 = vmatprep.subr.bf16.mxu0 0
        %670 = vmatpush1.bf16.xpose.msra.mxu0 0
        %671 = vmatprep.subr.bf16.mxu0 0
        %672 = vmatpush1.bf16.xpose.msra.mxu0 0
        %673 = vmatprep.subr.bf16.mxu0 0
        %674 = vmatpush1.bf16.xpose.msra.mxu0 0
        %675 = vmatprep.mubr.bf16.mxu0 0
        %676 = vmatmul.mubr.bf16.gmra.mrb[0].mxu0 %v638
        %v677 = vpop.f32.mrb[0].mxu0
        %v678 = vadd.f32 0.0, %v677
        %v679 = vpop.f32.mrb[0].mxu0
        %v680 = vpop.f32.mrb[0].mxu0
        %v681 = vpop.f32.mrb[0].mxu0
        %682 = vdwg.mxu0
        %683 = vrot.lane.b32.xlu0 %v537, 96
        %v684 = vpop.permute.xlu0 %683
        %v686 = vsel %vm540, %v537, 0
        %v689 = vsel %vm540, %v684, 0
        %691 = vmatprep.subr.bf16.mxu0 0
        %692 = vmatpush1.bf16.xpose.msra.mxu0 %v689
        %693 = vmatprep.subr.bf16.mxu0 0
        %694 = vmatpush1.bf16.xpose.msra.mxu0 0
        %695 = vmatprep.subr.bf16.mxu0 0
        %696 = vmatpush1.bf16.xpose.msra.mxu0 0
        %697 = vmatprep.subr.bf16.mxu0 0
        %698 = vmatpush1.bf16.xpose.msra.mxu0 0
        %699 = vmatprep.subr.bf16.mxu0 0
        %700 = vmatpush1.bf16.xpose.msra.mxu0 0
        %701 = vmatprep.subr.bf16.mxu0 0
        %702 = vmatpush1.bf16.xpose.msra.mxu0 0
        %703 = vmatprep.subr.bf16.mxu0 0
        %704 = vmatpush1.bf16.xpose.msra.mxu0 0
        %705 = vmatprep.subr.bf16.mxu0 0
        %706 = vmatpush1.bf16.xpose.msra.mxu0 0
        %707 = vmatprep.subr.bf16.mxu0 0
        %708 = vmatpush1.bf16.xpose.msra.mxu0 0
        %709 = vmatprep.subr.bf16.mxu0 0
        %710 = vmatpush1.bf16.xpose.msra.mxu0 0
        %711 = vmatprep.subr.bf16.mxu0 0
        %712 = vmatpush1.bf16.xpose.msra.mxu0 0
        %713 = vmatprep.subr.bf16.mxu0 0
        %714 = vmatpush1.bf16.xpose.msra.mxu0 0
        %715 = vmatprep.subr.bf16.mxu0 0
        %716 = vmatpush1.bf16.xpose.msra.mxu0 0
        %717 = vmatprep.subr.bf16.mxu0 0
        %718 = vmatpush1.bf16.xpose.msra.mxu0 0
        %719 = vmatprep.subr.bf16.mxu0 0
        %720 = vmatpush1.bf16.xpose.msra.mxu0 0
        %721 = vmatprep.subr.bf16.mxu0 0
        %722 = vmatpush1.bf16.xpose.msra.mxu0 0
        %723 = vmatprep.mubr.bf16.mxu0 0
        %724 = vmatmul.mubr.bf16.gmra.mrb[0].mxu0 %v686
        %v725 = vpop.f32.mrb[0].mxu0
        %v726 = vadd.f32 0.0, %v725
        %v727 = vpop.f32.mrb[0].mxu0
        %v728 = vpop.f32.mrb[0].mxu0
        %v729 = vpop.f32.mrb[0].mxu0
        %730 = vdwg.mxu0
        %v731 = vmul.f32 %v582, 0.35355338
        %v732 = vmul.f32 %v630, 0.35355338
        %v733 = vmul.f32 %v678, 0.35355338
        %v734 = vmul.f32 %v726, 0.35355338
        %v735 = vsel %vm439, 1, 0
        %vm736 = vcmp.eq.s32.totalorder %v735, 1
        %v737 = vsel %vm736, -1e+09, %v731
        %v738 = vsel %vm736, -1e+09, %v732
        %v739 = vsel %vm736, -1e+09, %v733
        %v740 = vsel %vm736, -1e+09, %v734
        %v741 = vsel %vm540, %v737, -inf
        %742 = vmax.xlane.f32.xlu0 %v741
        %v743 = vpop.xlane.xlu0 %742
        %v744 = vsel %vm540, %v738, -inf
        %745 = vmax.xlane.f32.xlu0 %v744
        %v746 = vpop.xlane.xlu0 %745
        %v747 = vsel %vm540, %v739, -inf
        %748 = vmax.xlane.f32.xlu0 %v747
        %v749 = vpop.xlane.xlu0 %748
        %v750 = vsel %vm540, %v740, -inf
        %751 = vmax.xlane.f32.xlu0 %v750
        %v752 = vpop.xlane.xlu0 %751
        %v753 = vsub.f32 %v737, %v743
        %v754 = vsub.f32 %v738, %v746
        %v755 = vsub.f32 %v739, %v749
        %v756 = vsub.f32 %v740, %v752
        %v757 = vmul.f32 %v753, 1.442695
        %v758 = vpow.pop %v757
        %v759 = vmul.f32 %v754, 1.442695
        %v760 = vpow.pop %v759
        %v761 = vmul.f32 %v755, 1.442695
        %v762 = vpow.pop %v761
        %v763 = vmul.f32 %v756, 1.442695
        %v764 = vpow.pop %v763
        %v765 = vsel %vm540, %v758, 0.0
        %766 = vadd.xlane.f32.xlu0 %v765
        %v767 = vpop.xlane.xlu0 %766
        %v768 = vsel %vm540, %v760, 0.0
        %769 = vadd.xlane.f32.xlu0 %v768
        %v770 = vpop.xlane.xlu0 %769
        %v771 = vsel %vm540, %v762, 0.0
        %772 = vadd.xlane.f32.xlu0 %v771
        %v773 = vpop.xlane.xlu0 %772
        %v774 = vsel %vm540, %v764, 0.0
        %775 = vadd.xlane.f32.xlu0 %v774
        %v776 = vpop.xlane.xlu0 %775
        %v777 = vrcp.pop %v767
        %v778 = vrcp.pop %v770
        %v779 = vrcp.pop %v773
        %v780 = vrcp.pop %v776
        %v781 = vmul.f32 %v758, %v777
        %v782 = vmul.f32 %v760, %v778
        %v783 = vmul.f32 %v762, %v779
        %v784 = vmul.f32 %v764, %v780
        %v785 = vpack.c.bf16 %v781, %v781
        %v786 = vpack.c.bf16 %v782, %v782
        %v787 = vpack.c.bf16 %v783, %v783
        %v788 = vpack.c.bf16 %v784, %v784
        %789 = vrot.lane.b32.xlu0 %v530, 64
        %v790 = vpop.permute.xlu0 %789
        %v792 = vsel %vm540, %v785, 0
        %vm794 = vcmask 1043456
        %v796 = vsel %vm794, %v790, 0
        %798 = vmatprep.subr.bf16.mxu0 0
        %799 = vmatpush1.bf16.msra.mxu0 %v796
        %800 = vmatprep.subr.bf16.mxu0 0
        %801 = vmatpush1.bf16.msra.mxu0 0
        %802 = vmatprep.subr.bf16.mxu0 0
        %803 = vmatpush1.bf16.msra.mxu0 0
        %804 = vmatprep.subr.bf16.mxu0 0
        %805 = vmatpush1.bf16.msra.mxu0 0
        %806 = vmatprep.subr.bf16.mxu0 0
        %807 = vmatpush1.bf16.msra.mxu0 0
        %808 = vmatprep.subr.bf16.mxu0 0
        %809 = vmatpush1.bf16.msra.mxu0 0
        %810 = vmatprep.subr.bf16.mxu0 0
        %811 = vmatpush1.bf16.msra.mxu0 0
        %812 = vmatprep.subr.bf16.mxu0 0
        %813 = vmatpush1.bf16.msra.mxu0 0
        %814 = vmatprep.subr.bf16.mxu0 0
        %815 = vmatpush1.bf16.msra.mxu0 0
        %816 = vmatprep.subr.bf16.mxu0 0
        %817 = vmatpush1.bf16.msra.mxu0 0
        %818 = vmatprep.subr.bf16.mxu0 0
        %819 = vmatpush1.bf16.msra.mxu0 0
        %820 = vmatprep.subr.bf16.mxu0 0
        %821 = vmatpush1.bf16.msra.mxu0 0
        %822 = vmatprep.subr.bf16.mxu0 0
        %823 = vmatpush1.bf16.msra.mxu0 0
        %824 = vmatprep.subr.bf16.mxu0 0
        %825 = vmatpush1.bf16.msra.mxu0 0
        %826 = vmatprep.subr.bf16.mxu0 0
        %827 = vmatpush1.bf16.msra.mxu0 0
        %828 = vmatprep.subr.bf16.mxu0 0
        %829 = vmatpush1.bf16.msra.mxu0 0
        %830 = vmatprep.mubr.bf16.mxu0 0
        %831 = vmatmul.mubr.bf16.gmra.mrb[0].mxu0 %v792
        %v832 = vpop.f32.mrb[0].mxu0
        %v833 = vadd.f32 0.0, %v832
        %v834 = vpop.f32.mrb[0].mxu0
        %v835 = vpop.f32.mrb[0].mxu0
        %v836 = vpop.f32.mrb[0].mxu0
        %837 = vdwg.mxu0
        %838 = vrot.lane.b32.xlu0 %v533, 64
        %v839 = vpop.permute.xlu0 %838
        %v841 = vsel %vm540, %v786, 0
        %v844 = vsel %vm794, %v839, 0
        %846 = vmatprep.subr.bf16.mxu0 0
        %847 = vmatpush1.bf16.msra.mxu0 %v844
        %848 = vmatprep.subr.bf16.mxu0 0
        %849 = vmatpush1.bf16.msra.mxu0 0
        %850 = vmatprep.subr.bf16.mxu0 0
        %851 = vmatpush1.bf16.msra.mxu0 0
        %852 = vmatprep.subr.bf16.mxu0 0
        %853 = vmatpush1.bf16.msra.mxu0 0
        %854 = vmatprep.subr.bf16.mxu0 0
        %855 = vmatpush1.bf16.msra.mxu0 0
        %856 = vmatprep.subr.bf16.mxu0 0
        %857 = vmatpush1.bf16.msra.mxu0 0
        %858 = vmatprep.subr.bf16.mxu0 0
        %859 = vmatpush1.bf16.msra.mxu0 0
        %860 = vmatprep.subr.bf16.mxu0 0
        %861 = vmatpush1.bf16.msra.mxu0 0
        %862 = vmatprep.subr.bf16.mxu0 0
        %863 = vmatpush1.bf16.msra.mxu0 0
        %864 = vmatprep.subr.bf16.mxu0 0
        %865 = vmatpush1.bf16.msra.mxu0 0
        %866 = vmatprep.subr.bf16.mxu0 0
        %867 = vmatpush1.bf16.msra.mxu0 0
        %868 = vmatprep.subr.bf16.mxu0 0
        %869 = vmatpush1.bf16.msra.mxu0 0
        %870 = vmatprep.subr.bf16.mxu0 0
        %871 = vmatpush1.bf16.msra.mxu0 0
        %872 = vmatprep.subr.bf16.mxu0 0
        %873 = vmatpush1.bf16.msra.mxu0 0
        %874 = vmatprep.subr.bf16.mxu0 0
        %875 = vmatpush1.bf16.msra.mxu0 0
        %876 = vmatprep.subr.bf16.mxu0 0
        %877 = vmatpush1.bf16.msra.mxu0 0
        %878 = vmatprep.mubr.bf16.mxu0 0
        %879 = vmatmul.mubr.bf16.gmra.mrb[0].mxu0 %v841
        %v880 = vpop.f32.mrb[0].mxu0
        %v881 = vadd.f32 0.0, %v880
        %v882 = vpop.f32.mrb[0].mxu0
        %v883 = vpop.f32.mrb[0].mxu0
        %v884 = vpop.f32.mrb[0].mxu0
        %885 = vdwg.mxu0
        %886 = vrot.lane.b32.xlu0 %v535, 64
        %v887 = vpop.permute.xlu0 %886
        %v889 = vsel %vm540, %v787, 0
        %v892 = vsel %vm794, %v887, 0
        %894 = vmatprep.subr.bf16.mxu0 0
        %895 = vmatpush1.bf16.msra.mxu0 %v892
        %896 = vmatprep.subr.bf16.mxu0 0
        %897 = vmatpush1.bf16.msra.mxu0 0
        %898 = vmatprep.subr.bf16.mxu0 0
        %899 = vmatpush1.bf16.msra.mxu0 0
        %900 = vmatprep.subr.bf16.mxu0 0
        %901 = vmatpush1.bf16.msra.mxu0 0
        %902 = vmatprep.subr.bf16.mxu0 0
        %903 = vmatpush1.bf16.msra.mxu0 0
        %904 = vmatprep.subr.bf16.mxu0 0
        %905 = vmatpush1.bf16.msra.mxu0 0
        %906 = vmatprep.subr.bf16.mxu0 0
        %907 = vmatpush1.bf16.msra.mxu0 0
        %908 = vmatprep.subr.bf16.mxu0 0
        %909 = vmatpush1.bf16.msra.mxu0 0
        %910 = vmatprep.subr.bf16.mxu0 0
        %911 = vmatpush1.bf16.msra.mxu0 0
        %912 = vmatprep.subr.bf16.mxu0 0
        %913 = vmatpush1.bf16.msra.mxu0 0
        %914 = vmatprep.subr.bf16.mxu0 0
        %915 = vmatpush1.bf16.msra.mxu0 0
        %916 = vmatprep.subr.bf16.mxu0 0
        %917 = vmatpush1.bf16.msra.mxu0 0
        %918 = vmatprep.subr.bf16.mxu0 0
        %919 = vmatpush1.bf16.msra.mxu0 0
        %920 = vmatprep.subr.bf16.mxu0 0
        %921 = vmatpush1.bf16.msra.mxu0 0
        %922 = vmatprep.subr.bf16.mxu0 0
        %923 = vmatpush1.bf16.msra.mxu0 0
        %924 = vmatprep.subr.bf16.mxu0 0
        %925 = vmatpush1.bf16.msra.mxu0 0
        %926 = vmatprep.mubr.bf16.mxu0 0
        %927 = vmatmul.mubr.bf16.gmra.mrb[0].mxu0 %v889
        %v928 = vpop.f32.mrb[0].mxu0
        %v929 = vadd.f32 0.0, %v928
        %v930 = vpop.f32.mrb[0].mxu0
        %v931 = vpop.f32.mrb[0].mxu0
        %v932 = vpop.f32.mrb[0].mxu0
        %933 = vdwg.mxu0
        %934 = vrot.lane.b32.xlu0 %v537, 64
        %v935 = vpop.permute.xlu0 %934
        %v937 = vsel %vm540, %v788, 0
        %v940 = vsel %vm794, %v935, 0
        %942 = vmatprep.subr.bf16.mxu0 0
        %943 = vmatpush1.bf16.msra.mxu0 %v940
        %944 = vmatprep.subr.bf16.mxu0 0
        %945 = vmatpush1.bf16.msra.mxu0 0
        %946 = vmatprep.subr.bf16.mxu0 0
        %947 = vmatpush1.bf16.msra.mxu0 0
        %948 = vmatprep.subr.bf16.mxu0 0
        %949 = vmatpush1.bf16.msra.mxu0 0
        %950 = vmatprep.subr.bf16.mxu0 0
        %951 = vmatpush1.bf16.msra.mxu0 0
        %952 = vmatprep.subr.bf16.mxu0 0
        %953 = vmatpush1.bf16.msra.mxu0 0
        %954 = vmatprep.subr.bf16.mxu0 0
        %955 = vmatpush1.bf16.msra.mxu0 0
        %956 = vmatprep.subr.bf16.mxu0 0
        %957 = vmatpush1.bf16.msra.mxu0 0
        %958 = vmatprep.subr.bf16.mxu0 0
        %959 = vmatpush1.bf16.msra.mxu0 0
        %960 = vmatprep.subr.bf16.mxu0 0
        %961 = vmatpush1.bf16.msra.mxu0 0
        %962 = vmatprep.subr.bf16.mxu0 0
        %963 = vmatpush1.bf16.msra.mxu0 0
        %964 = vmatprep.subr.bf16.mxu0 0
        %965 = vmatpush1.bf16.msra.mxu0 0
        %966 = vmatprep.subr.bf16.mxu0 0
        %967 = vmatpush1.bf16.msra.mxu0 0
        %968 = vmatprep.subr.bf16.mxu0 0
        %969 = vmatpush1.bf16.msra.mxu0 0
        %970 = vmatprep.subr.bf16.mxu0 0
        %971 = vmatpush1.bf16.msra.mxu0 0
        %972 = vmatprep.subr.bf16.mxu0 0
        %973 = vmatpush1.bf16.msra.mxu0 0
        %974 = vmatprep.mubr.bf16.mxu0 0
        %975 = vmatmul.mubr.bf16.gmra.mrb[0].mxu0 %v937
        %v976 = vpop.f32.mrb[0].mxu0
        %v977 = vadd.f32 0.0, %v976
        %v978 = vpop.f32.mrb[0].mxu0
        %v979 = vpop.f32.mrb[0].mxu0
        %v980 = vpop.f32.mrb[0].mxu0
        %981 = vdwg.mxu0
        %983 = vrot.lane.b32.xlu0 %v881, 8
        %v984 = vpop.permute.xlu0 %983
        %987 = vrot.lane.b32.xlu0 %v929, 16
        %v988 = vpop.permute.xlu0 %987
        %991 = vrot.lane.b32.xlu0 %v977, 24
        %v992 = vpop.permute.xlu0 %991
        %v994 = vsel %vm540, %v833, %v984
        %vm995 = vcmask 130048
        %v996 = vsel %vm995, %v994, %v988
        %vm997 = vcmask 195584
        %v998 = vsel %vm997, %v996, %v992
        %v999 = vpack.c.bf16 %v998, %v998
        %1000 = vrot.lane.b32.xlu0 %v483, 32
        %v1001 = vpop.permute.xlu0 %1000
        %1002 = vrot.lane.b32.xlu0 %v484, 32
        %v1003 = vpop.permute.xlu0 %1002
        %v1007 = vsel %vm442, %v999, 0
        %1009 = vmatprep.subr.bf16.mxu0 0
        %1010 = vmatpush1.bf16.msra.mxu0 %v1001
        %1011 = vmatprep.subr.bf16.mxu0 0
        %1012 = vmatpush1.bf16.msra.mxu0 %v1003
        %1013 = vmatprep.subr.bf16.mxu0 0
        %1014 = vmatpush1.bf16.msra.mxu0 0
        %1015 = vmatprep.subr.bf16.mxu0 0
        %1016 = vmatpush1.bf16.msra.mxu0 0
        %1017 = vmatprep.subr.bf16.mxu0 0
        %1018 = vmatpush1.bf16.msra.mxu0 0
        %1019 = vmatprep.subr.bf16.mxu0 0
        %1020 = vmatpush1.bf16.msra.mxu0 0
        %1021 = vmatprep.subr.bf16.mxu0 0
        %1022 = vmatpush1.bf16.msra.mxu0 0
        %1023 = vmatprep.subr.bf16.mxu0 0
        %1024 = vmatpush1.bf16.msra.mxu0 0
        %1025 = vmatprep.subr.bf16.mxu0 0
        %1026 = vmatpush1.bf16.msra.mxu0 0
        %1027 = vmatprep.subr.bf16.mxu0 0
        %1028 = vmatpush1.bf16.msra.mxu0 0
        %1029 = vmatprep.subr.bf16.mxu0 0
        %1030 = vmatpush1.bf16.msra.mxu0 0
        %1031 = vmatprep.subr.bf16.mxu0 0
        %1032 = vmatpush1.bf16.msra.mxu0 0
        %1033 = vmatprep.subr.bf16.mxu0 0
        %1034 = vmatpush1.bf16.msra.mxu0 0
        %1035 = vmatprep.subr.bf16.mxu0 0
        %1036 = vmatpush1.bf16.msra.mxu0 0
        %1037 = vmatprep.subr.bf16.mxu0 0
        %1038 = vmatpush1.bf16.msra.mxu0 0
        %1039 = vmatprep.subr.bf16.mxu0 0
        %1040 = vmatpush1.bf16.msra.mxu0 0
        %1041 = vmatprep.mubr.bf16.mxu0 0
        %1042 = vmatmul.mubr.bf16.gmra.mrb[0].mxu0 %v1007
        %v1043 = vpop.f32.mrb[0].mxu0
        %v1044 = vadd.f32 0.0, %v1043
        %v1045 = vpop.f32.mrb[0].mxu0
        %v1046 = vpop.f32.mrb[0].mxu0
        %v1047 = vpop.f32.mrb[0].mxu0
        %1048 = vdwg.mxu0
        %v1049 = vadd.f32 %v415, %v1044
        %v1050 = vsel %vm442, %v1049, 0.0
        %1051 = vadd.xlane.f32.xlu0 %v1050
        %v1052 = vpop.xlane.xlu0 %1051
        %v1053 = vmul.f32 %v1052, %v446
        %v1054 = vsub.f32 %v1049, %v1053
        %v1055 = vmul.f32 %v1054, %v1054
        %v1056 = vsel %vm442, %v1055, 0.0
        %1057 = vadd.xlane.f32.xlu0 %v1056
        %v1058 = vpop.xlane.xlu0 %1057
        %v1059 = vmul.f32 %v1058, 0.032258064
        %v1060 = vrsqrt.pop %v1059
        %v1061 = vmul.f32 %v1059, %v1060
        %vm1062 = vcmp.eq.f32.partialorder %v1059, inf
        %v1063 = vsel %vm1062, %v1059, %v1061
        %vm1064 = vcmp.eq.f32.partialorder %v1059, 0.0
        %v1065 = vand.u32 %v1059, 2147483648
        %v1066 = vsel %vm1064, %v1065, %v1063
        %v1067 = vadd.f32 %v1066, 1e-06
        %v1068 = vrcp.pop %v1067
        %v1069 = vmul.f32 %v1054, %v1068
        %v1070 = vlaneseq
        %v1071 = vshrl.u32 %v1070, 7
        %v1072 = vsub.s32 2, %v1071
        %v1073 = vrot.slane %v417, %v1072
        %v1074 = vmul.f32 %v1073, %v1069
        %v1075 = vlaneseq
        %v1076 = vshrl.u32 %v1075, 7
        %v1077 = vsub.s32 3, %v1076
        %v1078 = vrot.slane %v417, %v1077
        %v1079 = vadd.f32 %v1074, %v1078
        %v1080 = vpack.c.bf16 %v1079, %v1079
        %v1085 = vunpack.c.l.b16 %v422
        %v1086 = vunpack.c.l.b16 %v423
        %v1087 = vunpack.c.l.b16 %v424
        %v1088 = vunpack.c.l.b16 %v425
        %v1089 = vpack.c.b16 %v1086, %v1085
        %v1090 = vpack.c.b16 %v1088, %v1087
        %v1094 = vsel %vm442, %v1080, 0
        %1096 = vmatprep.subr.bf16.mxu0 0
        %1097 = vmatpush1.bf16.msra.mxu0 %v1089
        %1098 = vmatprep.subr.bf16.mxu0 0
        %1099 = vmatpush1.bf16.msra.mxu0 %v1090
        %1100 = vmatprep.subr.bf16.mxu0 0
        %1101 = vmatpush1.bf16.msra.mxu0 0
        %1102 = vmatprep.subr.bf16.mxu0 0
        %1103 = vmatpush1.bf16.msra.mxu0 0
        %1104 = vmatprep.subr.bf16.mxu0 0
        %1105 = vmatpush1.bf16.msra.mxu0 0
        %1106 = vmatprep.subr.bf16.mxu0 0
        %1107 = vmatpush1.bf16.msra.mxu0 0
        %1108 = vmatprep.subr.bf16.mxu0 0
        %1109 = vmatpush1.bf16.msra.mxu0 0
        %1110 = vmatprep.subr.bf16.mxu0 0
        %1111 = vmatpush1.bf16.msra.mxu0 0
        %1112 = vmatprep.subr.bf16.mxu0 0
        %1113 = vmatpush1.bf16.msra.mxu0 0
        %1114 = vmatprep.subr.bf16.mxu0 0
        %1115 = vmatpush1.bf16.msra.mxu0 0
        %1116 = vmatprep.subr.bf16.mxu0 0
        %1117 = vmatpush1.bf16.msra.mxu0 0
        %1118 = vmatprep.subr.bf16.mxu0 0
        %1119 = vmatpush1.bf16.msra.mxu0 0
        %1120 = vmatprep.subr.bf16.mxu0 0
        %1121 = vmatpush1.bf16.msra.mxu0 0
        %1122 = vmatprep.subr.bf16.mxu0 0
        %1123 = vmatpush1.bf16.msra.mxu0 0
        %1124 = vmatprep.subr.bf16.mxu0 0
        %1125 = vmatpush1.bf16.msra.mxu0 0
        %1126 = vmatprep.subr.bf16.mxu0 0
        %1127 = vmatpush1.bf16.msra.mxu0 0
        %1128 = vmatprep.mubr.bf16.mxu0 0
        %1129 = vmatmul.mubr.bf16.gmra.mrb[0].mxu0 %v1094
        %v1130 = vpop.f32.mrb[0].mxu0
        %v1131 = vadd.f32 0.0, %v1130
        %v1132 = vpop.f32.mrb[0].mxu0
        %v1133 = vpop.f32.mrb[0].mxu0
        %v1134 = vpop.f32.mrb[0].mxu0
        %1135 = vdwg.mxu0
        %v1136 = vpack.c.bf16 %v1131, %v1131
        %v1137 = vpack.c.bf16 %v416, %v416
        %1138 = vrot.lane.b32.xlu0 %v1089, 96
        %v1139 = vpop.permute.xlu0 %1138
        %1140 = vrot.lane.b32.xlu0 %v1090, 96
        %v1141 = vpop.permute.xlu0 %1140
        %v1145 = vsel %vm442, %v1137, 0
        %1147 = vmatprep.subr.bf16.mxu0 0
        %1148 = vmatpush1.bf16.msra.mxu0 %v1139
        %1149 = vmatprep.subr.bf16.mxu0 0
        %1150 = vmatpush1.bf16.msra.mxu0 %v1141
        %1151 = vmatprep.subr.bf16.mxu0 0
        %1152 = vmatpush1.bf16.msra.mxu0 0
        %1153 = vmatprep.subr.bf16.mxu0 0
        %1154 = vmatpush1.bf16.msra.mxu0 0
        %1155 = vmatprep.subr.bf16.mxu0 0
        %1156 = vmatpush1.bf16.msra.mxu0 0
        %1157 = vmatprep.subr.bf16.mxu0 0
        %1158 = vmatpush1.bf16.msra.mxu0 0
        %1159 = vmatprep.subr.bf16.mxu0 0
        %1160 = vmatpush1.bf16.msra.mxu0 0
        %1161 = vmatprep.subr.bf16.mxu0 0
        %1162 = vmatpush1.bf16.msra.mxu0 0
        %1163 = vmatprep.subr.bf16.mxu0 0
        %1164 = vmatpush1.bf16.msra.mxu0 0
        %1165 = vmatprep.subr.bf16.mxu0 0
        %1166 = vmatpush1.bf16.msra.mxu0 0
        %1167 = vmatprep.subr.bf16.mxu0 0
        %1168 = vmatpush1.bf16.msra.mxu0 0
        %1169 = vmatprep.subr.bf16.mxu0 0
        %1170 = vmatpush1.bf16.msra.mxu0 0
        %1171 = vmatprep.subr.bf16.mxu0 0
        %1172 = vmatpush1.bf16.msra.mxu0 0
        %1173 = vmatprep.subr.bf16.mxu0 0
        %1174 = vmatpush1.bf16.msra.mxu0 0
        %1175 = vmatprep.subr.bf16.mxu0 0
        %1176 = vmatpush1.bf16.msra.mxu0 0
        %1177 = vmatprep.subr.bf16.mxu0 0
        %1178 = vmatpush1.bf16.msra.mxu0 0
        %1179 = vmatprep.mubr.bf16.mxu0 0
        %1180 = vmatmul.mubr.bf16.gmra.mrb[0].mxu0 %v1145
        %v1181 = vpop.f32.mrb[0].mxu0
        %v1182 = vadd.f32 0.0, %v1181
        %v1183 = vpop.f32.mrb[0].mxu0
        %v1184 = vpop.f32.mrb[0].mxu0
        %v1185 = vpop.f32.mrb[0].mxu0
        %1186 = vdwg.mxu0
        %v1187 = vpack.c.bf16 %v1182, %v1182
        %1189 = vrot.lane.b32.xlu0 %v1136, 120
        %v1190 = vpop.permute.xlu0 %1189
        %1191 = vrot.lane.b32.xlu0 %v1136, 112
        %v1192 = vpop.permute.xlu0 %1191
        %1193 = vrot.lane.b32.xlu0 %v1136, 104
        %v1194 = vpop.permute.xlu0 %1193
        %1196 = vrot.lane.b32.xlu0 %v1187, 120
        %v1197 = vpop.permute.xlu0 %1196
        %1198 = vrot.lane.b32.xlu0 %v1187, 112
        %v1199 = vpop.permute.xlu0 %1198
        %1200 = vrot.lane.b32.xlu0 %v1187, 104
        %v1201 = vpop.permute.xlu0 %1200
        %v1203 = vsel %vm540, %v1136, 0
        %v1206 = vsel %vm540, %v1187, 0
        %1208 = vmatprep.subr.bf16.mxu0 0
        %1209 = vmatpush1.bf16.xpose.msra.mxu0 %v1206
        %1210 = vmatprep.subr.bf16.mxu0 0
        %1211 = vmatpush1.bf16.xpose.msra.mxu0 0
        %1212 = vmatprep.subr.bf16.mxu0 0
        %1213 = vmatpush1.bf16.xpose.msra.mxu0 0
        %1214 = vmatprep.subr.bf16.mxu0 0
        %1215 = vmatpush1.bf16.xpose.msra.mxu0 0
        %1216 = vmatprep.subr.bf16.mxu0 0
        %1217 = vmatpush1.bf16.xpose.msra.mxu0 0
        %1218 = vmatprep.subr.bf16.mxu0 0
        %1219 = vmatpush1.bf16.xpose.msra.mxu0 0
        %1220 = vmatprep.subr.bf16.mxu0 0
        %1221 = vmatpush1.bf16.xpose.msra.mxu0 0
        %1222 = vmatprep.subr.bf16.mxu0 0
        %1223 = vmatpush1.bf16.xpose.msra.mxu0 0
        %1224 = vmatprep.subr.bf16.mxu0 0
        %1225 = vmatpush1.bf16.xpose.msra.mxu0 0
        %1226 = vmatprep.subr.bf16.mxu0 0
        %1227 = vmatpush1.bf16.xpose.msra.mxu0 0
        %1228 = vmatprep.subr.bf16.mxu0 0
        %1229 = vmatpush1.bf16.xpose.msra.mxu0 0
        %1230 = vmatprep.subr.bf16.mxu0 0
        %1231 = vmatpush1.bf16.xpose.msra.mxu0 0
        %1232 = vmatprep.subr.bf16.mxu0 0
        %1233 = vmatpush1.bf16.xpose.msra.mxu0 0
        %1234 = vmatprep.subr.bf16.mxu0 0
        %1235 = vmatpush1.bf16.xpose.msra.mxu0 0
        %1236 = vmatprep.subr.bf16.mxu0 0
        %1237 = vmatpush1.bf16.xpose.msra.mxu0 0
        %1238 = vmatprep.subr.bf16.mxu0 0
        %1239 = vmatpush1.bf16.xpose.msra.mxu0 0
        %1240 = vmatprep.mubr.bf16.mxu0 0
        %1241 = vmatmul.mubr.bf16.gmra.mrb[0].mxu0 %v1203
        %v1242 = vpop.f32.mrb[0].mxu0
        %v1243 = vadd.f32 0.0, %v1242
        %v1244 = vpop.f32.mrb[0].mxu0
        %v1245 = vpop.f32.mrb[0].mxu0
        %v1246 = vpop.f32.mrb[0].mxu0
        %1247 = vdwg.mxu0
        %v1249 = vsel %vm540, %v1190, 0
        %v1252 = vsel %vm540, %v1197, 0
        %1254 = vmatprep.subr.bf16.mxu0 0
        %1255 = vmatpush1.bf16.xpose.msra.mxu0 %v1252
        %1256 = vmatprep.subr.bf16.mxu0 0
        %1257 = vmatpush1.bf16.xpose.msra.mxu0 0
        %1258 = vmatprep.subr.bf16.mxu0 0
        %1259 = vmatpush1.bf16.xpose.msra.mxu0 0
        %1260 = vmatprep.subr.bf16.mxu0 0
        %1261 = vmatpush1.bf16.xpose.msra.mxu0 0
        %1262 = vmatprep.subr.bf16.mxu0 0
        %1263 = vmatpush1.bf16.xpose.msra.mxu0 0
        %1264 = vmatprep.subr.bf16.mxu0 0
        %1265 = vmatpush1.bf16.xpose.msra.mxu0 0
        %1266 = vmatprep.subr.bf16.mxu0 0
        %1267 = vmatpush1.bf16.xpose.msra.mxu0 0
        %1268 = vmatprep.subr.bf16.mxu0 0
        %1269 = vmatpush1.bf16.xpose.msra.mxu0 0
        %1270 = vmatprep.subr.bf16.mxu0 0
        %1271 = vmatpush1.bf16.xpose.msra.mxu0 0
        %1272 = vmatprep.subr.bf16.mxu0 0
        %1273 = vmatpush1.bf16.xpose.msra.mxu0 0
        %1274 = vmatprep.subr.bf16.mxu0 0
        %1275 = vmatpush1.bf16.xpose.msra.mxu0 0
        %1276 = vmatprep.subr.bf16.mxu0 0
        %1277 = vmatpush1.bf16.xpose.msra.mxu0 0
        %1278 = vmatprep.subr.bf16.mxu0 0
        %1279 = vmatpush1.bf16.xpose.msra.mxu0 0
        %1280 = vmatprep.subr.bf16.mxu0 0
        %1281 = vmatpush1.bf16.xpose.msra.mxu0 0
        %1282 = vmatprep.subr.bf16.mxu0 0
        %1283 = vmatpush1.bf16.xpose.msra.mxu0 0
        %1284 = vmatprep.subr.bf16.mxu0 0
        %1285 = vmatpush1.bf16.xpose.msra.mxu0 0
        %1286 = vmatprep.mubr.bf16.mxu0 0
        %1287 = vmatmul.mubr.bf16.gmra.mrb[0].mxu0 %v1249
        %v1288 = vpop.f32.mrb[0].mxu0
        %v1289 = vadd.f32 0.0, %v1288
        %v1290 = vpop.f32.mrb[0].mxu0
        %v1291 = vpop.f32.mrb[0].mxu0
        %v1292 = vpop.f32.mrb[0].mxu0
        %1293 = vdwg.mxu0
        %v1295 = vsel %vm540, %v1192, 0
        %v1298 = vsel %vm540, %v1199, 0
        %1300 = vmatprep.subr.bf16.mxu0 0
        %1301 = vmatpush1.bf16.xpose.msra.mxu0 %v1298
        %1302 = vmatprep.subr.bf16.mxu0 0
        %1303 = vmatpush1.bf16.xpose.msra.mxu0 0
        %1304 = vmatprep.subr.bf16.mxu0 0
        %1305 = vmatpush1.bf16.xpose.msra.mxu0 0
        %1306 = vmatprep.subr.bf16.mxu0 0
        %1307 = vmatpush1.bf16.xpose.msra.mxu0 0
        %1308 = vmatprep.subr.bf16.mxu0 0
        %1309 = vmatpush1.bf16.xpose.msra.mxu0 0
        %1310 = vmatprep.subr.bf16.mxu0 0
        %1311 = vmatpush1.bf16.xpose.msra.mxu0 0
        %1312 = vmatprep.subr.bf16.mxu0 0
        %1313 = vmatpush1.bf16.xpose.msra.mxu0 0
        %1314 = vmatprep.subr.bf16.mxu0 0
        %1315 = vmatpush1.bf16.xpose.msra.mxu0 0
        %1316 = vmatprep.subr.bf16.mxu0 0
        %1317 = vmatpush1.bf16.xpose.msra.mxu0 0
        %1318 = vmatprep.subr.bf16.mxu0 0
        %1319 = vmatpush1.bf16.xpose.msra.mxu0 0
        %1320 = vmatprep.subr.bf16.mxu0 0
        %1321 = vmatpush1.bf16.xpose.msra.mxu0 0
        %1322 = vmatprep.subr.bf16.mxu0 0
        %1323 = vmatpush1.bf16.xpose.msra.mxu0 0
        %1324 = vmatprep.subr.bf16.mxu0 0
        %1325 = vmatpush1.bf16.xpose.msra.mxu0 0
        %1326 = vmatprep.subr.bf16.mxu0 0
        %1327 = vmatpush1.bf16.xpose.msra.mxu0 0
        %1328 = vmatprep.subr.bf16.mxu0 0
        %1329 = vmatpush1.bf16.xpose.msra.mxu0 0
        %1330 = vmatprep.subr.bf16.mxu0 0
        %1331 = vmatpush1.bf16.xpose.msra.mxu0 0
        %1332 = vmatprep.mubr.bf16.mxu0 0
        %1333 = vmatmul.mubr.bf16.gmra.mrb[0].mxu0 %v1295
        %v1334 = vpop.f32.mrb[0].mxu0
        %v1335 = vadd.f32 0.0, %v1334
        %v1336 = vpop.f32.mrb[0].mxu0
        %v1337 = vpop.f32.mrb[0].mxu0
        %v1338 = vpop.f32.mrb[0].mxu0
        %1339 = vdwg.mxu0
        %v1341 = vsel %vm540, %v1194, 0
        %v1344 = vsel %vm540, %v1201, 0
        %1346 = vmatprep.subr.bf16.mxu0 0
        %1347 = vmatpush1.bf16.xpose.msra.mxu0 %v1344
        %1348 = vmatprep.subr.bf16.mxu0 0
        %1349 = vmatpush1.bf16.xpose.msra.mxu0 0
        %1350 = vmatprep.subr.bf16.mxu0 0
        %1351 = vmatpush1.bf16.xpose.msra.mxu0 0
        %1352 = vmatprep.subr.bf16.mxu0 0
        %1353 = vmatpush1.bf16.xpose.msra.mxu0 0
        %1354 = vmatprep.subr.bf16.mxu0 0
        %1355 = vmatpush1.bf16.xpose.msra.mxu0 0
        %1356 = vmatprep.subr.bf16.mxu0 0
        %1357 = vmatpush1.bf16.xpose.msra.mxu0 0
        %1358 = vmatprep.subr.bf16.mxu0 0
        %1359 = vmatpush1.bf16.xpose.msra.mxu0 0
        %1360 = vmatprep.subr.bf16.mxu0 0
        %1361 = vmatpush1.bf16.xpose.msra.mxu0 0
        %1362 = vmatprep.subr.bf16.mxu0 0
        %1363 = vmatpush1.bf16.xpose.msra.mxu0 0
        %1364 = vmatprep.subr.bf16.mxu0 0
        %1365 = vmatpush1.bf16.xpose.msra.mxu0 0
        %1366 = vmatprep.subr.bf16.mxu0 0
        %1367 = vmatpush1.bf16.xpose.msra.mxu0 0
        %1368 = vmatprep.subr.bf16.mxu0 0
        %1369 = vmatpush1.bf16.xpose.msra.mxu0 0
        %1370 = vmatprep.subr.bf16.mxu0 0
        %1371 = vmatpush1.bf16.xpose.msra.mxu0 0
        %1372 = vmatprep.subr.bf16.mxu0 0
        %1373 = vmatpush1.bf16.xpose.msra.mxu0 0
        %1374 = vmatprep.subr.bf16.mxu0 0
        %1375 = vmatpush1.bf16.xpose.msra.mxu0 0
        %1376 = vmatprep.subr.bf16.mxu0 0
        %1377 = vmatpush1.bf16.xpose.msra.mxu0 0
        %1378 = vmatprep.mubr.bf16.mxu0 0
        %1379 = vmatmul.mubr.bf16.gmra.mrb[0].mxu0 %v1341
        %v1380 = vpop.f32.mrb[0].mxu0
        %v1381 = vadd.f32 0.0, %v1380
        %v1382 = vpop.f32.mrb[0].mxu0
        %v1383 = vpop.f32.mrb[0].mxu0
        %v1384 = vpop.f32.mrb[0].mxu0
        %1385 = vdwg.mxu0
        %v1386 = vmul.f32 %v1243, 0.35355338
        %v1387 = vmul.f32 %v1289, 0.35355338
        %v1388 = vmul.f32 %v1335, 0.35355338
        %v1389 = vmul.f32 %v1381, 0.35355338
        %v1390 = vsel %vm441, 1, 0
        %vm1391 = vcmp.eq.s32.totalorder %v1390, 1
        %v1392 = vsel %vm1391, -1e+09, %v1386
        %v1393 = vsel %vm1391, -1e+09, %v1387
        %v1394 = vsel %vm1391, -1e+09, %v1388
        %v1395 = vsel %vm1391, -1e+09, %v1389
        %v1396 = vsel %vm540, %v1392, -inf
        %1397 = vmax.xlane.f32.xlu0 %v1396
        %v1398 = vpop.xlane.xlu0 %1397
        %v1399 = vsel %vm540, %v1393, -inf
        %1400 = vmax.xlane.f32.xlu0 %v1399
        %v1401 = vpop.xlane.xlu0 %1400
        %v1402 = vsel %vm540, %v1394, -inf
        %1403 = vmax.xlane.f32.xlu0 %v1402
        %v1404 = vpop.xlane.xlu0 %1403
        %v1405 = vsel %vm540, %v1395, -inf
        %1406 = vmax.xlane.f32.xlu0 %v1405
        %v1407 = vpop.xlane.xlu0 %1406
        %v1408 = vsub.f32 %v1392, %v1398
        %v1409 = vsub.f32 %v1393, %v1401
        %v1410 = vsub.f32 %v1394, %v1404
        %v1411 = vsub.f32 %v1395, %v1407
        %v1412 = vmul.f32 %v1408, 1.442695
        %v1413 = vpow.pop %v1412
        %v1414 = vmul.f32 %v1409, 1.442695
        %v1415 = vpow.pop %v1414
        %v1416 = vmul.f32 %v1410, 1.442695
        %v1417 = vpow.pop %v1416
        %v1418 = vmul.f32 %v1411, 1.442695
        %v1419 = vpow.pop %v1418
        %v1420 = vsel %vm540, %v1413, 0.0
        %1421 = vadd.xlane.f32.xlu0 %v1420
        %v1422 = vpop.xlane.xlu0 %1421
        %v1423 = vsel %vm540, %v1415, 0.0
        %1424 = vadd.xlane.f32.xlu0 %v1423
        %v1425 = vpop.xlane.xlu0 %1424
        %v1426 = vsel %vm540, %v1417, 0.0
        %1427 = vadd.xlane.f32.xlu0 %v1426
        %v1428 = vpop.xlane.xlu0 %1427
        %v1429 = vsel %vm540, %v1419, 0.0
        %1430 = vadd.xlane.f32.xlu0 %v1429
        %v1431 = vpop.xlane.xlu0 %1430
        %v1432 = vrcp.pop %v1422
        %v1433 = vrcp.pop %v1425
        %v1434 = vrcp.pop %v1428
        %v1435 = vrcp.pop %v1431
        %v1436 = vmul.f32 %v1413, %v1432
        %v1437 = vmul.f32 %v1415, %v1433
        %v1438 = vmul.f32 %v1417, %v1434
        %v1439 = vmul.f32 %v1419, %v1435
        %v1440 = vpack.c.bf16 %v1436, %v1436
        %v1441 = vpack.c.bf16 %v1437, %v1437
        %v1442 = vpack.c.bf16 %v1438, %v1438
        %v1443 = vpack.c.bf16 %v1439, %v1439
        %1444 = vrot.lane.b32.xlu0 %v1187, 96
        %v1445 = vpop.permute.xlu0 %1444
        %v1447 = vsel %vm540, %v1440, 0
        %v1450 = vsel %vm794, %v1445, 0
        %1452 = vmatprep.subr.bf16.mxu0 0
        %1453 = vmatpush1.bf16.msra.mxu0 %v1450
        %1454 = vmatprep.subr.bf16.mxu0 0
        %1455 = vmatpush1.bf16.msra.mxu0 0
        %1456 = vmatprep.subr.bf16.mxu0 0
        %1457 = vmatpush1.bf16.msra.mxu0 0
        %1458 = vmatprep.subr.bf16.mxu0 0
        %1459 = vmatpush1.bf16.msra.mxu0 0
        %1460 = vmatprep.subr.bf16.mxu0 0
        %1461 = vmatpush1.bf16.msra.mxu0 0
        %1462 = vmatprep.subr.bf16.mxu0 0
        %1463 = vmatpush1.bf16.msra.mxu0 0
        %1464 = vmatprep.subr.bf16.mxu0 0
        %1465 = vmatpush1.bf16.msra.mxu0 0
        %1466 = vmatprep.subr.bf16.mxu0 0
        %1467 = vmatpush1.bf16.msra.mxu0 0
        %1468 = vmatprep.subr.bf16.mxu0 0
        %1469 = vmatpush1.bf16.msra.mxu0 0
        %1470 = vmatprep.subr.bf16.mxu0 0
        %1471 = vmatpush1.bf16.msra.mxu0 0
        %1472 = vmatprep.subr.bf16.mxu0 0
        %1473 = vmatpush1.bf16.msra.mxu0 0
        %1474 = vmatprep.subr.bf16.mxu0 0
        %1475 = vmatpush1.bf16.msra.mxu0 0
        %1476 = vmatprep.subr.bf16.mxu0 0
        %1477 = vmatpush1.bf16.msra.mxu0 0
        %1478 = vmatprep.subr.bf16.mxu0 0
        %1479 = vmatpush1.bf16.msra.mxu0 0
        %1480 = vmatprep.subr.bf16.mxu0 0
        %1481 = vmatpush1.bf16.msra.mxu0 0
        %1482 = vmatprep.subr.bf16.mxu0 0
        %1483 = vmatpush1.bf16.msra.mxu0 0
        %1484 = vmatprep.mubr.bf16.mxu0 0
        %1485 = vmatmul.mubr.bf16.gmra.mrb[0].mxu0 %v1447
        %v1486 = vpop.f32.mrb[0].mxu0
        %v1487 = vadd.f32 0.0, %v1486
        %v1488 = vpop.f32.mrb[0].mxu0
        %v1489 = vpop.f32.mrb[0].mxu0
        %v1490 = vpop.f32.mrb[0].mxu0
        %1491 = vdwg.mxu0
        %1492 = vrot.lane.b32.xlu0 %v1197, 96
        %v1493 = vpop.permute.xlu0 %1492
        %v1495 = vsel %vm540, %v1441, 0
        %v1498 = vsel %vm794, %v1493, 0
        %1500 = vmatprep.subr.bf16.mxu0 0
        %1501 = vmatpush1.bf16.msra.mxu0 %v1498
        %1502 = vmatprep.subr.bf16.mxu0 0
        %1503 = vmatpush1.bf16.msra.mxu0 0
        %1504 = vmatprep.subr.bf16.mxu0 0
        %1505 = vmatpush1.bf16.msra.mxu0 0
        %1506 = vmatprep.subr.bf16.mxu0 0
        %1507 = vmatpush1.bf16.msra.mxu0 0
        %1508 = vmatprep.subr.bf16.mxu0 0
        %1509 = vmatpush1.bf16.msra.mxu0 0
        %1510 = vmatprep.subr.bf16.mxu0 0
        %1511 = vmatpush1.bf16.msra.mxu0 0
        %1512 = vmatprep.subr.bf16.mxu0 0
        %1513 = vmatpush1.bf16.msra.mxu0 0
        %1514 = vmatprep.subr.bf16.mxu0 0
        %1515 = vmatpush1.bf16.msra.mxu0 0
        %1516 = vmatprep.subr.bf16.mxu0 0
        %1517 = vmatpush1.bf16.msra.mxu0 0
        %1518 = vmatprep.subr.bf16.mxu0 0
        %1519 = vmatpush1.bf16.msra.mxu0 0
        %1520 = vmatprep.subr.bf16.mxu0 0
        %1521 = vmatpush1.bf16.msra.mxu0 0
        %1522 = vmatprep.subr.bf16.mxu0 0
        %1523 = vmatpush1.bf16.msra.mxu0 0
        %1524 = vmatprep.subr.bf16.mxu0 0
        %1525 = vmatpush1.bf16.msra.mxu0 0
        %1526 = vmatprep.subr.bf16.mxu0 0
        %1527 = vmatpush1.bf16.msra.mxu0 0
        %1528 = vmatprep.subr.bf16.mxu0 0
        %1529 = vmatpush1.bf16.msra.mxu0 0
        %1530 = vmatprep.subr.bf16.mxu0 0
        %1531 = vmatpush1.bf16.msra.mxu0 0
        %1532 = vmatprep.mubr.bf16.mxu0 0
        %1533 = vmatmul.mubr.bf16.gmra.mrb[0].mxu0 %v1495
        %v1534 = vpop.f32.mrb[0].mxu0
        %v1535 = vadd.f32 0.0, %v1534
        %v1536 = vpop.f32.mrb[0].mxu0
        %v1537 = vpop.f32.mrb[0].mxu0
        %v1538 = vpop.f32.mrb[0].mxu0
        %1539 = vdwg.mxu0
        %1540 = vrot.lane.b32.xlu0 %v1199, 96
        %v1541 = vpop.permute.xlu0 %1540
        %v1543 = vsel %vm540, %v1442, 0
        %v1546 = vsel %vm794, %v1541, 0
        %1548 = vmatprep.subr.bf16.mxu0 0
        %1549 = vmatpush1.bf16.msra.mxu0 %v1546
        %1550 = vmatprep.subr.bf16.mxu0 0
        %1551 = vmatpush1.bf16.msra.mxu0 0
        %1552 = vmatprep.subr.bf16.mxu0 0
        %1553 = vmatpush1.bf16.msra.mxu0 0
        %1554 = vmatprep.subr.bf16.mxu0 0
        %1555 = vmatpush1.bf16.msra.mxu0 0
        %1556 = vmatprep.subr.bf16.mxu0 0
        %1557 = vmatpush1.bf16.msra.mxu0 0
        %1558 = vmatprep.subr.bf16.mxu0 0
        %1559 = vmatpush1.bf16.msra.mxu0 0
        %1560 = vmatprep.subr.bf16.mxu0 0
        %1561 = vmatpush1.bf16.msra.mxu0 0
        %1562 = vmatprep.subr.bf16.mxu0 0
        %1563 = vmatpush1.bf16.msra.mxu0 0
        %1564 = vmatprep.subr.bf16.mxu0 0
        %1565 = vmatpush1.bf16.msra.mxu0 0
        %1566 = vmatprep.subr.bf16.mxu0 0
        %1567 = vmatpush1.bf16.msra.mxu0 0
        %1568 = vmatprep.subr.bf16.mxu0 0
        %1569 = vmatpush1.bf16.msra.mxu0 0
        %1570 = vmatprep.subr.bf16.mxu0 0
        %1571 = vmatpush1.bf16.msra.mxu0 0
        %1572 = vmatprep.subr.bf16.mxu0 0
        %1573 = vmatpush1.bf16.msra.mxu0 0
        %1574 = vmatprep.subr.bf16.mxu0 0
        %1575 = vmatpush1.bf16.msra.mxu0 0
        %1576 = vmatprep.subr.bf16.mxu0 0
        %1577 = vmatpush1.bf16.msra.mxu0 0
        %1578 = vmatprep.subr.bf16.mxu0 0
        %1579 = vmatpush1.bf16.msra.mxu0 0
        %1580 = vmatprep.mubr.bf16.mxu0 0
        %1581 = vmatmul.mubr.bf16.gmra.mrb[0].mxu0 %v1543
        %v1582 = vpop.f32.mrb[0].mxu0
        %v1583 = vadd.f32 0.0, %v1582
        %v1584 = vpop.f32.mrb[0].mxu0
        %v1585 = vpop.f32.mrb[0].mxu0
        %v1586 = vpop.f32.mrb[0].mxu0
        %1587 = vdwg.mxu0
        %1588 = vrot.lane.b32.xlu0 %v1201, 96
        %v1589 = vpop.permute.xlu0 %1588
        %v1591 = vsel %vm540, %v1443, 0
        %v1594 = vsel %vm794, %v1589, 0
        %1596 = vmatprep.subr.bf16.mxu0 0
        %1597 = vmatpush1.bf16.msra.mxu0 %v1594
        %1598 = vmatprep.subr.bf16.mxu0 0
        %1599 = vmatpush1.bf16.msra.mxu0 0
        %1600 = vmatprep.subr.bf16.mxu0 0
        %1601 = vmatpush1.bf16.msra.mxu0 0
        %1602 = vmatprep.subr.bf16.mxu0 0
        %1603 = vmatpush1.bf16.msra.mxu0 0
        %1604 = vmatprep.subr.bf16.mxu0 0
        %1605 = vmatpush1.bf16.msra.mxu0 0
        %1606 = vmatprep.subr.bf16.mxu0 0
        %1607 = vmatpush1.bf16.msra.mxu0 0
        %1608 = vmatprep.subr.bf16.mxu0 0
        %1609 = vmatpush1.bf16.msra.mxu0 0
        %1610 = vmatprep.subr.bf16.mxu0 0
        %1611 = vmatpush1.bf16.msra.mxu0 0
        %1612 = vmatprep.subr.bf16.mxu0 0
        %1613 = vmatpush1.bf16.msra.mxu0 0
        %1614 = vmatprep.subr.bf16.mxu0 0
        %1615 = vmatpush1.bf16.msra.mxu0 0
        %1616 = vmatprep.subr.bf16.mxu0 0
        %1617 = vmatpush1.bf16.msra.mxu0 0
        %1618 = vmatprep.subr.bf16.mxu0 0
        %1619 = vmatpush1.bf16.msra.mxu0 0
        %1620 = vmatprep.subr.bf16.mxu0 0
        %1621 = vmatpush1.bf16.msra.mxu0 0
        %1622 = vmatprep.subr.bf16.mxu0 0
        %1623 = vmatpush1.bf16.msra.mxu0 0
        %1624 = vmatprep.subr.bf16.mxu0 0
        %1625 = vmatpush1.bf16.msra.mxu0 0
        %1626 = vmatprep.subr.bf16.mxu0 0
        %1627 = vmatpush1.bf16.msra.mxu0 0
        %1628 = vmatprep.mubr.bf16.mxu0 0
        %1629 = vmatmul.mubr.bf16.gmra.mrb[0].mxu0 %v1591
        %v1630 = vpop.f32.mrb[0].mxu0
        %v1631 = vadd.f32 0.0, %v1630
        %v1632 = vpop.f32.mrb[0].mxu0
        %v1633 = vpop.f32.mrb[0].mxu0
        %v1634 = vpop.f32.mrb[0].mxu0
        %1635 = vdwg.mxu0
        %1637 = vrot.lane.b32.xlu0 %v1535, 8
        %v1638 = vpop.permute.xlu0 %1637
        %1641 = vrot.lane.b32.xlu0 %v1583, 16
        %v1642 = vpop.permute.xlu0 %1641
        %1645 = vrot.lane.b32.xlu0 %v1631, 24
        %v1646 = vpop.permute.xlu0 %1645
        %v1648 = vsel %vm540, %v1487, %v1638
        %v1649 = vsel %vm995, %v1648, %v1642
        %v1650 = vsel %vm997, %v1649, %v1646
        %v1651 = vpack.c.bf16 %v1650, %v1650
        %1652 = vrot.lane.b32.xlu0 %v1089, 32
        %v1653 = vpop.permute.xlu0 %1652
        %1654 = vrot.lane.b32.xlu0 %v1090, 32
        %v1655 = vpop.permute.xlu0 %1654
        %v1659 = vsel %vm442, %v1651, 0
        %1661 = vmatprep.subr.bf16.mxu0 0
        %1662 = vmatpush1.bf16.msra.mxu0 %v1653
        %1663 = vmatprep.subr.bf16.mxu0 0
        %1664 = vmatpush1.bf16.msra.mxu0 %v1655
        %1665 = vmatprep.subr.bf16.mxu0 0
        %1666 = vmatpush1.bf16.msra.mxu0 0
        %1667 = vmatprep.subr.bf16.mxu0 0
        %1668 = vmatpush1.bf16.msra.mxu0 0
        %1669 = vmatprep.subr.bf16.mxu0 0
        %1670 = vmatpush1.bf16.msra.mxu0 0
        %1671 = vmatprep.subr.bf16.mxu0 0
        %1672 = vmatpush1.bf16.msra.mxu0 0
        %1673 = vmatprep.subr.bf16.mxu0 0
        %1674 = vmatpush1.bf16.msra.mxu0 0
        %1675 = vmatprep.subr.bf16.mxu0 0
        %1676 = vmatpush1.bf16.msra.mxu0 0
        %1677 = vmatprep.subr.bf16.mxu0 0
        %1678 = vmatpush1.bf16.msra.mxu0 0
        %1679 = vmatprep.subr.bf16.mxu0 0
        %1680 = vmatpush1.bf16.msra.mxu0 0
        %1681 = vmatprep.subr.bf16.mxu0 0
        %1682 = vmatpush1.bf16.msra.mxu0 0
        %1683 = vmatprep.subr.bf16.mxu0 0
        %1684 = vmatpush1.bf16.msra.mxu0 0
        %1685 = vmatprep.subr.bf16.mxu0 0
        %1686 = vmatpush1.bf16.msra.mxu0 0
        %1687 = vmatprep.subr.bf16.mxu0 0
        %1688 = vmatpush1.bf16.msra.mxu0 0
        %1689 = vmatprep.subr.bf16.mxu0 0
        %1690 = vmatpush1.bf16.msra.mxu0 0
        %1691 = vmatprep.subr.bf16.mxu0 0
        %1692 = vmatpush1.bf16.msra.mxu0 0
        %1693 = vmatprep.mubr.bf16.mxu0 0
        %1694 = vmatmul.mubr.bf16.gmra.mrb[0].mxu0 %v1659
        %v1695 = vpop.f32.mrb[0].mxu0
        %v1696 = vadd.f32 0.0, %v1695
        %v1697 = vpop.f32.mrb[0].mxu0
        %v1698 = vpop.f32.mrb[0].mxu0
        %v1699 = vpop.f32.mrb[0].mxu0
        %1700 = vdwg.mxu0
        %v1701 = vadd.f32 %v1049, %v1696
        %v1702 = vsel %vm442, %v1701, 0.0
        %1703 = vadd.xlane.f32.xlu0 %v1702
        %v1704 = vpop.xlane.xlu0 %1703
        %v1705 = vmul.f32 %v1704, %v446
        %v1706 = vsub.f32 %v1701, %v1705
        %v1707 = vmul.f32 %v1706, %v1706
        %v1708 = vsel %vm442, %v1707, 0.0
        %1709 = vadd.xlane.f32.xlu0 %v1708
        %v1710 = vpop.xlane.xlu0 %1709
        %v1711 = vmul.f32 %v1710, 0.032258064
        %v1712 = vrsqrt.pop %v1711
        %v1713 = vmul.f32 %v1711, %v1712
        %vm1714 = vcmp.eq.f32.partialorder %v1711, inf
        %v1715 = vsel %vm1714, %v1711, %v1713
        %vm1716 = vcmp.eq.f32.partialorder %v1711, 0.0
        %v1717 = vand.u32 %v1711, 2147483648
        %v1718 = vsel %vm1716, %v1717, %v1715
        %v1719 = vadd.f32 %v1718, 1e-06
        %v1720 = vrcp.pop %v1719
        %v1721 = vmul.f32 %v1706, %v1720
        %v1722 = vlaneseq
        %v1723 = vshrl.u32 %v1722, 7
        %v1724 = vsub.s32 4, %v1723
        %v1725 = vrot.slane %v417, %v1724
        %v1726 = vmul.f32 %v1725, %v1721
        %v1727 = vlaneseq
        %v1728 = vshrl.u32 %v1727, 7
        %v1729 = vsub.s32 5, %v1728
        %v1730 = vrot.slane %v417, %v1729
        %v1731 = vadd.f32 %v1726, %v1730
        %v1732 = vpack.c.bf16 %v1731, %v1731
        %v1733 = vlaneseq
        %v1734 = vshrl.u32 %v1733, 7
        %v1735 = vsub.s32 7, %v1734
        %v1736 = vrot.slane %v417, %v1735
        %v1741 = vunpack.c.l.b16 %v426
        %v1742 = vunpack.c.l.b16 %v427
        %v1743 = vunpack.c.l.b16 %v428
        %v1744 = vunpack.c.l.b16 %v429
        %v1745 = vpack.c.b16 %v1742, %v1741
        %v1746 = vpack.c.b16 %v1744, %v1743
        %v1750 = vsel %vm442, %v1732, 0
        %1752 = vmatprep.subr.bf16.mxu0 0
        %1753 = vmatpush1.bf16.msra.mxu0 %v1745
        %1754 = vmatprep.subr.bf16.mxu0 0
        %1755 = vmatpush1.bf16.msra.mxu0 %v1746
        %1756 = vmatprep.subr.bf16.mxu0 0
        %1757 = vmatpush1.bf16.msra.mxu0 0
        %1758 = vmatprep.subr.bf16.mxu0 0
        %1759 = vmatpush1.bf16.msra.mxu0 0
        %1760 = vmatprep.subr.bf16.mxu0 0
        %1761 = vmatpush1.bf16.msra.mxu0 0
        %1762 = vmatprep.subr.bf16.mxu0 0
        %1763 = vmatpush1.bf16.msra.mxu0 0
        %1764 = vmatprep.subr.bf16.mxu0 0
        %1765 = vmatpush1.bf16.msra.mxu0 0
        %1766 = vmatprep.subr.bf16.mxu0 0
        %1767 = vmatpush1.bf16.msra.mxu0 0
        %1768 = vmatprep.subr.bf16.mxu0 0
        %1769 = vmatpush1.bf16.msra.mxu0 0
        %1770 = vmatprep.subr.bf16.mxu0 0
        %1771 = vmatpush1.bf16.msra.mxu0 0
        %1772 = vmatprep.subr.bf16.mxu0 0
        %1773 = vmatpush1.bf16.msra.mxu0 0
        %1774 = vmatprep.subr.bf16.mxu0 0
        %1775 = vmatpush1.bf16.msra.mxu0 0
        %1776 = vmatprep.subr.bf16.mxu0 0
        %1777 = vmatpush1.bf16.msra.mxu0 0
        %1778 = vmatprep.subr.bf16.mxu0 0
        %1779 = vmatpush1.bf16.msra.mxu0 0
        %1780 = vmatprep.subr.bf16.mxu0 0
        %1781 = vmatpush1.bf16.msra.mxu0 0
        %1782 = vmatprep.subr.bf16.mxu0 0
        %1783 = vmatpush1.bf16.msra.mxu0 0
        %1784 = vmatprep.mubr.bf16.mxu0 0
        %1785 = vmatmul.mubr.bf16.gmra.mrb[0].mxu0 %v1750
        %v1786 = vpop.f32.mrb[0].mxu0
        %v1787 = vadd.f32 %v1736, %v1786
        %v1788 = vpop.f32.mrb[0].mxu0
        %v1789 = vpop.f32.mrb[0].mxu0
        %v1790 = vpop.f32.mrb[0].mxu0
        %1791 = vdwg.mxu0
        %v1792 = vmax.f32 %v1787, 0.0
        %v1793 = vpack.c.bf16 %v1792, %v1792
        %v1794 = vlaneseq
        %v1795 = vshrl.u32 %v1794, 7
        %v1796 = vsub.s32 6, %v1795
        %v1797 = vrot.slane %v417, %v1796
        %v1806 = vunpack.c.l.b16 %v430
        %v1807 = vunpack.c.l.b16 %v431
        %v1808 = vunpack.c.l.b16 %v432
        %v1809 = vunpack.c.l.b16 %v433
        %v1810 = vunpack.c.l.b16 %v434
        %v1811 = vunpack.c.l.b16 %v435
        %v1812 = vunpack.c.l.b16 %v436
        %v1813 = vunpack.c.l.b16 %v437
        %v1814 = vpack.c.b16 %v1807, %v1806
        %v1815 = vpack.c.b16 %v1809, %v1808
        %v1816 = vpack.c.b16 %v1811, %v1810
        %v1817 = vpack.c.b16 %v1813, %v1812
        %vm1822 = vcmask 523264
        %v1824 = vsel %vm1822, %v1793, 0
        %1826 = vmatprep.subr.bf16.mxu0 0
        %1827 = vmatpush1.bf16.msra.mxu0 %v1814
        %1828 = vmatprep.subr.bf16.mxu0 0
        %1829 = vmatpush1.bf16.msra.mxu0 %v1815
        %1830 = vmatprep.subr.bf16.mxu0 0
        %1831 = vmatpush1.bf16.msra.mxu0 %v1816
        %1832 = vmatprep.subr.bf16.mxu0 0
        %1833 = vmatpush1.bf16.msra.mxu0 %v1817
        %1834 = vmatprep.subr.bf16.mxu0 0
        %1835 = vmatpush1.bf16.msra.mxu0 0
        %1836 = vmatprep.subr.bf16.mxu0 0
        %1837 = vmatpush1.bf16.msra.mxu0 0
        %1838 = vmatprep.subr.bf16.mxu0 0
        %1839 = vmatpush1.bf16.msra.mxu0 0
        %1840 = vmatprep.subr.bf16.mxu0 0
        %1841 = vmatpush1.bf16.msra.mxu0 0
        %1842 = vmatprep.subr.bf16.mxu0 0
        %1843 = vmatpush1.bf16.msra.mxu0 0
        %1844 = vmatprep.subr.bf16.mxu0 0
        %1845 = vmatpush1.bf16.msra.mxu0 0
        %1846 = vmatprep.subr.bf16.mxu0 0
        %1847 = vmatpush1.bf16.msra.mxu0 0
        %1848 = vmatprep.subr.bf16.mxu0 0
        %1849 = vmatpush1.bf16.msra.mxu0 0
        %1850 = vmatprep.subr.bf16.mxu0 0
        %1851 = vmatpush1.bf16.msra.mxu0 0
        %1852 = vmatprep.subr.bf16.mxu0 0
        %1853 = vmatpush1.bf16.msra.mxu0 0
        %1854 = vmatprep.subr.bf16.mxu0 0
        %1855 = vmatpush1.bf16.msra.mxu0 0
        %1856 = vmatprep.subr.bf16.mxu0 0
        %1857 = vmatpush1.bf16.msra.mxu0 0
        %1858 = vmatprep.mubr.bf16.mxu0 0
        %1859 = vmatmul.mubr.bf16.gmra.mrb[0].mxu0 %v1824
        %v1860 = vpop.f32.mrb[0].mxu0
        %v1861 = vadd.f32 %v1797, %v1860
        %v1862 = vpop.f32.mrb[0].mxu0
        %v1863 = vpop.f32.mrb[0].mxu0
        %v1864 = vpop.f32.mrb[0].mxu0
        %1865 = vdwg.mxu0
        %v1866 = vadd.f32 %v1701, %v1861
        %1867 = vst.msk [vmem:[%s413] sm:$0xff] %vm442, %v1866
        %s1868 = sand.u32 %s205, 1
        %s1869 = scalar_lea.sflag [#allocation4], %s1868
        %s1870 = sand.u32 %s205, 1
        %s1871 = smul.addr %s1870, 8
        %s1872 = scalar_lea.vmem [#allocation11], %s1871
        // Predicated region
        $region69: #{tpu_custom_call.1} parent=47 // pred_check
          %p1873 = pneg %p215
        $region70: #{tpu_custom_call.1} parent=47 // pred_check_branch
          %1875 = sbr.rel (%p1873) target = $region72
        $region71: #{tpu_custom_call.1} parent=47 // pred_region
          %s1877 = ssub.s32 128, 128
          %1878 = vsyncadd %s1869, %s1877
          %s1879 = smul.addr %s30, 128
          %s1880 = scalar_lea.hbm %s7, %s1879
          %s1882 = sshll.u32 %s1872, 4
          %s1883 = int_to_ptr.vmem [resolvable:$true] %s1882
          %1885 = dma.vmem_to_hbm [thread:$0]  %s1883, 128, %s1880, %s1869
        $region72: #{tpu_custom_call.1} parent=47 // pred_fallthru
          _
      $region48: #{tpu_custom_call.1} parent=5 // pred_fallthru
        _
      %p1886 = scmp.le.s32.totalorder 2, %s25
      // Predicated region
      $region73: #{tpu_custom_call.1} parent=5 // pred_check
        %p1887 = pneg %p1886
      $region74: #{tpu_custom_call.1} parent=5 // pred_check_branch
        %1889 = sbr.rel (%p1887) target = $region76
      $region75: #{tpu_custom_call.1} parent=5 // pred_region
        %s1890 = ssub.s32 %s25, 2
        // Predicated region
        $region77: #{tpu_custom_call.1} parent=75 // pred_check
          %p1891 = pneg %p221
        $region78: #{tpu_custom_call.1} parent=75 // pred_check_branch
          %1893 = sbr.rel (%p1891) target = $region80
        $region79: #{tpu_custom_call.1} parent=75 // pred_region
          %s1894 = sand.u32 %s206, 1
          %s1895 = scalar_lea.sflag [#allocation4], %s1894
          %s1896 = sand.u32 %s206, 1
          %s1897 = smul.addr %s1896, 8
          %s1898 = scalar_lea.vmem [#allocation11], %s1897
          %1899 = dma.done %s1895, 128
        $region80: #{tpu_custom_call.1} parent=75 // pred_fallthru
          _
      $region76: #{tpu_custom_call.1} parent=5 // pred_fallthru
        _
    $region6: #{tpu_custom_call.1} parent=1 // loop_footer
      %s29 = sadd.s32 1, %s25
    $region7: #{tpu_custom_call.1} parent=1 // loop_footer_branch
      %24 = sbr.rel target = $region3
    $region8: #{tpu_custom_call.1} parent=1 // loop_exit
      _
    %1900 = vsyncpa [#allocation3], 1
    %s1901 = scalar_lea.sflag [#allocation3], 1
    %1902 = vsyncpa %s1901, 1
    %1903 = vsyncpa [#allocation6], 1
    %s1904 = scalar_lea.sflag [#allocation6], 1
    %1905 = vsyncpa %s1904, 1
    %1906 = vsyncpa [#allocation9], 1
    %s1907 = scalar_lea.sflag [#allocation9], 1
    %1908 = vsyncpa %s1907, 1
    %1909 = vsyncpa [#allocation4], 1
    %s1910 = scalar_lea.sflag [#allocation4], 1
    %1911 = vsyncpa %s1910, 1

</llo_original>
